<compile_context>
chip_gen: v7x
topology: tpu7x:2x2x1
jax: 0.10.0
libtpu: 0.0.40
codegen_flags: <defaults>
</compile_context>

<pallas_src>
import functools

import jax
import jax.numpy as jnp
from jax import lax
from jax.experimental import pallas as pl
from jax.experimental.pallas import tpu as pltpu


# ----------------------------------------------------------------------------
# LSTM cell step (input projection precomputed)
# ----------------------------------------------------------------------------
def _lstm_cell_step(pre_gates, h, c, whh, n):
    """One LSTM cell update given a precomputed input projection.

    pre_gates: (B, 4n) = x_t @ W_ih^T + (b_ih + b_hh)
    Gate order follows PyTorch: [i, f, g, o], each of width n.
    Transcendentals are applied only where needed: sigmoid on [i|f] and [o],
    tanh on [g] and on the new cell state (5n*B EUP work/step, not 8n*B).
    """
    gates = pre_gates + jnp.dot(h, whh, preferred_element_type=jnp.float32)
    sig_if = jax.nn.sigmoid(gates[:, 0 * n:2 * n])     # [i | f] in one pass
    i = sig_if[:, 0 * n:1 * n]
    f = sig_if[:, 1 * n:2 * n]
    g = jnp.tanh(gates[:, 2 * n:3 * n])
    o = jax.nn.sigmoid(gates[:, 3 * n:4 * n])
    c_new = f * c + i * g
    h_new = o * jnp.tanh(c_new)
    return h_new, c_new


# ----------------------------------------------------------------------------
# Fused Pallas kernel
# ----------------------------------------------------------------------------
def _lstm_ae_kernel(x_ref, wih_e_ref, whh_e_ref, b_e_ref,
                    wih_d_ref, whh_d_ref, b_d_ref,
                    fc_w_ref, fc_b_ref,
                    cls_ref, rec_ref, *, T, B):
    """Fused LSTMAutoencoder forward.

    x_ref:     (T*B, D)    time-major flattened input (row t*B + b)
    wih_e_ref: (D, 4H)     encoder weight_ih_l0, transposed
    whh_e_ref: (H, 4H)     encoder weight_hh_l0, transposed
    b_e_ref:   (1, 4H)     encoder bias_ih + bias_hh
    wih_d_ref: (H, 4D)     decoder weight_ih_l0, transposed
    whh_d_ref: (D, 4D)     decoder weight_hh_l0, transposed
    b_d_ref:   (1, 4D)     decoder bias_ih + bias_hh
    fc_w_ref:  (H, Cp)     fc_class weight, transposed, zero-padded to 128 lanes
    fc_b_ref:  (1, Cp)     fc_class bias, zero-padded
    cls_ref:   (B, Cp)     lane-dense classification output
    rec_ref:   (B, T*D)    lane-dense reconstruction slab
    """
    H = whh_e_ref.shape[0]
    D = whh_d_ref.shape[0]

    # Hoisted weight / bias loads: resident across the whole recurrence.
    whh_e = whh_e_ref[...]
    wih_d, whh_d, b_d = wih_d_ref[...], whh_d_ref[...], b_d_ref[...]

    # Encoder input projection for ALL T timesteps in one MXU matmul,
    # off the serial path.
    pre_e = jnp.dot(x_ref[...], wih_e_ref[...],
                    preferred_element_type=jnp.float32) + b_e_ref[...]  # (T*B, 4H)

    h = jnp.zeros((B, H), jnp.float32)
    c = jnp.zeros((B, H), jnp.float32)
    hd = jnp.zeros((B, D), jnp.float32)
    cd = jnp.zeros((B, D), jnp.float32)

    # Interleaved encoder/decoder recurrence, fully unrolled (T static, small).
    # dec(t) depends only on enc(t); enc(t+1) is independent of dec(t), so the
    # scheduler overlaps adjacent iterations' MXU pushes/pops and EUP passes.
    # TODO(synk): for large T/B, switch to lax.fori_loop(..., unroll=k) and
    # stream rec per step to bound vreg live ranges.
    rec_steps = []
    for t in range(T):
        h, c = _lstm_cell_step(pre_e[t * B:(t + 1) * B, :], h, c, whh_e, H)
        pre_d_t = jnp.dot(h, wih_d, preferred_element_type=jnp.float32) + b_d
        hd, cd = _lstm_cell_step(pre_d_t, hd, cd, whh_d, D)
        rec_steps.append(hd)

    # Classifier head on the final encoder hidden state (lane-dense width).
    cls_ref[...] = (jnp.dot(h, fc_w_ref[...],
                            preferred_element_type=jnp.float32)
                    + fc_b_ref[...])

    # Single lane-dense store of the reconstruction: (B, T*D).
    rec_ref[...] = jnp.concatenate(rec_steps, axis=1)


# ----------------------------------------------------------------------------
# Wrapper
# ----------------------------------------------------------------------------
def lstm_autoencoder_forward(x, params):
    """Matches LSTMAutoencoder.forward: returns (classification, reconstruction).

    x: (B, T, D) batch-first, like nn.LSTM(batch_first=True).
    """
    B, T, D = x.shape
    H = params["enc_w_hh"].shape[1]
    C = params["fc_w"].shape[0]
    C_pad = max(128, ((C + 127) // 128) * 128)   # lane-dense classifier width
    f32 = jnp.float32

    # Time-major flattened input: row t*B + b is timestep t of sequence b.
    # (Negligible at toy sizes; at scale fetch (t, b-block) tiles directly via
    #  a BlockSpec index_map instead of materializing this copy.)
    x_tm = jnp.transpose(x, (1, 0, 2)).reshape(T * B, D).astype(f32)

    wih_e = jnp.transpose(params["enc_w_ih"]).astype(f32)             # (D, 4H)
    whh_e = jnp.transpose(params["enc_w_hh"]).astype(f32)             # (H, 4H)
    b_e = (params["enc_b_ih"] + params["enc_b_hh"]).reshape(1, 4 * H).astype(f32)
    wih_d = jnp.transpose(params["dec_w_ih"]).astype(f32)             # (H, 4D)
    whh_d = jnp.transpose(params["dec_w_hh"]).astype(f32)             # (D, 4D)
    b_d = (params["dec_b_ih"] + params["dec_b_hh"]).reshape(1, 4 * D).astype(f32)

    # Classifier head zero-padded to a lane-dense 128-wide output.
    fc_w = jnp.zeros((H, C_pad), f32).at[:, :C].set(
        jnp.transpose(params["fc_w"]).astype(f32))                    # (H, Cp)
    fc_b = jnp.zeros((1, C_pad), f32).at[:, :C].set(
        params["fc_b"].astype(f32))                                   # (1, Cp)

    kernel = functools.partial(_lstm_ae_kernel, T=T, B=B)
    vmem = pl.BlockSpec(memory_space=pltpu.MemorySpace.VMEM)

    # NOTE: at toy sizes everything fits untiled in VMEM in a single grid-less
    # call; for real batches add a grid over B with
    # dimension_semantics=("parallel",) (uses v7x's 2 TensorCores) and size
    # tiles against 64 MiB VMEM on v7x / 128 MiB on v5e/v6e.
    cls_pad, rec_slab = pl.pallas_call(
        kernel,
        out_shape=(jax.ShapeDtypeStruct((B, C_pad), f32),
                   jax.ShapeDtypeStruct((B, T * D), f32)),
        in_specs=[vmem] * 9,
        out_specs=(vmem, vmem),
    )(x_tm, wih_e, whh_e, b_e, wih_d, whh_d, b_d, fc_w, fc_b)

    classification = cls_pad[:, :C]
    reconstruction = rec_slab.reshape(B, T, D)
    return classification, reconstruction


# ----------------------------------------------------------------------------
# Pure-JAX reference (correctness self-check)
# ----------------------------------------------------------------------------
def _lstm_ref(x_btd, w_ih, w_hh, b_ih, b_hh):
    B, T, D = x_btd.shape
    H = w_hh.shape[1]
    wih_t, whh_t = w_ih.T, w_hh.T
    b = b_ih + b_hh

    def step(carry, x_t):
        h, c = carry
        gates = x_t @ wih_t + h @ whh_t + b
        i = jax.nn.sigmoid(gates[:, 0 * H:1 * H])
        f = jax.nn.sigmoid(gates[:, 1 * H:2 * H])
        g = jnp.tanh(gates[:, 2 * H:3 * H])
        o = jax.nn.sigmoid(gates[:, 3 * H:4 * H])
        c = f * c + i * g
        h = o * jnp.tanh(c)
        return (h, c), h

    (h_fin, _), outs = lax.scan(step,
                                (jnp.zeros((B, H)), jnp.zeros((B, H))),
                                jnp.transpose(x_btd, (1, 0, 2)))
    return jnp.transpose(outs, (1, 0, 2)), h_fin


def _forward_ref(x, p):
    enc_out, enc_hn = _lstm_ref(x, p["enc_w_ih"], p["enc_w_hh"],
                                p["enc_b_ih"], p["enc_b_hh"])
    rec, _ = _lstm_ref(enc_out, p["dec_w_ih"], p["dec_w_hh"],
                       p["dec_b_ih"], p["dec_b_hh"])
    cls = enc_hn @ p["fc_w"].T + p["fc_b"]
    return cls, rec


# ----------------------------------------------------------------------------
# Deterministic parameter init (PyTorch-like uniform(-1/sqrt(H), 1/sqrt(H)))
# ----------------------------------------------------------------------------
def init_params(key, input_size, hidden_size):
    ks = jax.random.split(key, 10)

    def u(k, shape, fan):
        bound = 1.0 / jnp.sqrt(fan)
        return jax.random.uniform(k, shape, jnp.float32, -bound, bound)

    H, D = hidden_size, input_size
    return {
        # encoder: nn.LSTM(D, H)
        "enc_w_ih": u(ks[0], (4 * H, D), H),
        "enc_w_hh": u(ks[1], (4 * H, H), H),
        "enc_b_ih": u(ks[2], (4 * H,), H),
        "enc_b_hh": u(ks[3], (4 * H,), H),
        # decoder: nn.LSTM(H, D)
        "dec_w_ih": u(ks[4], (4 * D, H), D),
        "dec_w_hh": u(ks[5], (4 * D, D), D),
        "dec_b_ih": u(ks[6], (4 * D,), D),
        "dec_b_hh": u(ks[7], (4 * D,), D),
        # fc_class: nn.Linear(H, 10)
        "fc_w": u(ks[8], (10, H), H),
        "fc_b": u(ks[9], (10,), H),
    }


if __name__ == "__main__":
    key = jax.random.PRNGKey(0)
    k_param, k_x = jax.random.split(key)

    B, T, INPUT_SIZE, HIDDEN_SIZE = 2, 8, 16, 32
    params = init_params(k_param, INPUT_SIZE, HIDDEN_SIZE)
    x = jax.random.normal(k_x, (B, T, INPUT_SIZE), jnp.float32)

    classification, reconstruction = jax.jit(lstm_autoencoder_forward)(x, params)
    classification = jax.block_until_ready(classification)
    reconstruction = jax.block_until_ready(reconstruction)

    assert classification.shape == (B, 10)
    assert reconstruction.shape == (B, T, INPUT_SIZE)

    cls_ref, rec_ref = _forward_ref(x, params)
    assert jnp.allclose(classification, cls_ref, rtol=1e-4, atol=1e-4)
    assert jnp.allclose(reconstruction, rec_ref, rtol=1e-4, atol=1e-4)

    print("KERNEL_OK")
</pallas_src>

<mosaic_0001>
module attributes {stable_mosaic.version = 11 : i64} {
  func.func @_lstm_ae_kernel(%arg0: memref<16x16xf32, #tpu.memory_space<vmem>>, %arg1: memref<16x128xf32, #tpu.memory_space<vmem>>, %arg2: memref<32x128xf32, #tpu.memory_space<vmem>>, %arg3: memref<1x128xf32, #tpu.memory_space<vmem>>, %arg4: memref<32x64xf32, #tpu.memory_space<vmem>>, %arg5: memref<16x64xf32, #tpu.memory_space<vmem>>, %arg6: memref<1x64xf32, #tpu.memory_space<vmem>>, %arg7: memref<32x128xf32, #tpu.memory_space<vmem>>, %arg8: memref<1x128xf32, #tpu.memory_space<vmem>>, %arg9: memref<2x128xf32, #tpu.memory_space<vmem>>, %arg10: memref<2x128xf32, #tpu.memory_space<vmem>>) attributes {dimension_semantics = [], scalar_prefetch = 0 : i64, scratch_operands = 0 : i64, tpu.core_type = #tpu.core_type<tc>} {
    %c0 = arith.constant 0 : index
    %c0_0 = arith.constant 0 : index
    %0 = vector.load %arg2[%c0, %c0_0] : memref<32x128xf32, #tpu.memory_space<vmem>>, vector<32x128xf32>
    %c0_1 = arith.constant 0 : index
    %c0_2 = arith.constant 0 : index
    %1 = vector.load %arg4[%c0_1, %c0_2] : memref<32x64xf32, #tpu.memory_space<vmem>>, vector<32x64xf32>
    %c0_3 = arith.constant 0 : index
    %c0_4 = arith.constant 0 : index
    %2 = vector.load %arg5[%c0_3, %c0_4] : memref<16x64xf32, #tpu.memory_space<vmem>>, vector<16x64xf32>
    %c0_5 = arith.constant 0 : index
    %c0_6 = arith.constant 0 : index
    %3 = vector.load %arg6[%c0_5, %c0_6] : memref<1x64xf32, #tpu.memory_space<vmem>>, vector<1x64xf32>
    %c0_7 = arith.constant 0 : index
    %c0_8 = arith.constant 0 : index
    %4 = vector.load %arg0[%c0_7, %c0_8] : memref<16x16xf32, #tpu.memory_space<vmem>>, vector<16x16xf32>
    %c0_9 = arith.constant 0 : index
    %c0_10 = arith.constant 0 : index
    %5 = vector.load %arg1[%c0_9, %c0_10] : memref<16x128xf32, #tpu.memory_space<vmem>>, vector<16x128xf32>
    %cst = arith.constant dense<0.000000e+00> : vector<16x128xf32>
    %6 = tpu.matmul %4, %5, %cst {dimension_numbers = #tpu.dot_dimension_numbers<[1], [0], [0], [1], [0, 0, 1, 1], [], []>} : vector<16x16xf32>, vector<16x128xf32>, vector<16x128xf32> -> vector<16x128xf32>
    %c0_11 = arith.constant 0 : index
    %c0_12 = arith.constant 0 : index
    %7 = vector.load %arg3[%c0_11, %c0_12] : memref<1x128xf32, #tpu.memory_space<vmem>>, vector<1x128xf32>
    %8 = vector.broadcast %7 : vector<1x128xf32> to vector<16x128xf32>
    %9 = arith.addf %6, %8 : vector<16x128xf32>
    %cst_13 = arith.constant 0.000000e+00 : f32
    %10 = vector.broadcast %cst_13 : f32 to vector<2x32xf32>
    %cst_14 = arith.constant 0.000000e+00 : f32
    %11 = vector.broadcast %cst_14 : f32 to vector<2x32xf32>
    %cst_15 = arith.constant 0.000000e+00 : f32
    %12 = vector.broadcast %cst_15 : f32 to vector<2x16xf32>
    %cst_16 = arith.constant 0.000000e+00 : f32
    %13 = vector.broadcast %cst_16 : f32 to vector<2x16xf32>
    %14 = vector.extract_strided_slice %9 {offsets = [0, 0], sizes = [2, 128], strides = [1, 1]} : vector<16x128xf32> to vector<2x128xf32>
    %cst_17 = arith.constant dense<0.000000e+00> : vector<2x128xf32>
    %15 = tpu.matmul %10, %0, %cst_17 {dimension_numbers = #tpu.dot_dimension_numbers<[1], [0], [0], [1], [0, 0, 1, 1], [], []>} : vector<2x32xf32>, vector<32x128xf32>, vector<2x128xf32> -> vector<2x128xf32>
    %16 = arith.addf %14, %15 : vector<2x128xf32>
    %17 = vector.extract_strided_slice %16 {offsets = [0, 0], sizes = [2, 64], strides = [1, 1]} : vector<2x128xf32> to vector<2x64xf32>
    %18 = arith.negf %17 : vector<2x64xf32>
    %19 = math.exp %18 : vector<2x64xf32>
    %cst_18 = arith.constant 1.000000e+00 : f32
    %20 = vector.broadcast %cst_18 : f32 to vector<2x64xf32>
    %21 = arith.addf %20, %19 : vector<2x64xf32>
    %22 = arith.divf %20, %21 : vector<2x64xf32>
    %23 = vector.extract_strided_slice %22 {offsets = [0, 0], sizes = [2, 32], strides = [1, 1]} : vector<2x64xf32> to vector<2x32xf32>
    %24 = vector.extract_strided_slice %22 {offsets = [0, 32], sizes = [2, 32], strides = [1, 1]} : vector<2x64xf32> to vector<2x32xf32>
    %25 = vector.extract_strided_slice %16 {offsets = [0, 64], sizes = [2, 32], strides = [1, 1]} : vector<2x128xf32> to vector<2x32xf32>
    %26 = math.tanh %25 : vector<2x32xf32>
    %27 = vector.extract_strided_slice %16 {offsets = [0, 96], sizes = [2, 32], strides = [1, 1]} : vector<2x128xf32> to vector<2x32xf32>
    %28 = arith.negf %27 : vector<2x32xf32>
    %29 = math.exp %28 : vector<2x32xf32>
    %cst_19 = arith.constant 1.000000e+00 : f32
    %30 = vector.broadcast %cst_19 : f32 to vector<2x32xf32>
    %31 = arith.addf %30, %29 : vector<2x32xf32>
    %32 = arith.divf %30, %31 : vector<2x32xf32>
    %33 = arith.mulf %24, %11 : vector<2x32xf32>
    %34 = arith.mulf %23, %26 : vector<2x32xf32>
    %35 = arith.addf %33, %34 : vector<2x32xf32>
    %36 = math.tanh %35 : vector<2x32xf32>
    %37 = arith.mulf %32, %36 : vector<2x32xf32>
    %cst_20 = arith.constant dense<0.000000e+00> : vector<2x64xf32>
    %38 = tpu.matmul %37, %1, %cst_20 {dimension_numbers = #tpu.dot_dimension_numbers<[1], [0], [0], [1], [0, 0, 1, 1], [], []>} : vector<2x32xf32>, vector<32x64xf32>, vector<2x64xf32> -> vector<2x64xf32>
    %39 = vector.broadcast %3 : vector<1x64xf32> to vector<2x64xf32>
    %40 = arith.addf %38, %39 : vector<2x64xf32>
    %cst_21 = arith.constant dense<0.000000e+00> : vector<2x64xf32>
    %41 = tpu.matmul %12, %2, %cst_21 {dimension_numbers = #tpu.dot_dimension_numbers<[1], [0], [0], [1], [0, 0, 1, 1], [], []>} : vector<2x16xf32>, vector<16x64xf32>, vector<2x64xf32> -> vector<2x64xf32>
    %42 = arith.addf %40, %41 : vector<2x64xf32>
    %43 = vector.extract_strided_slice %42 {offsets = [0, 0], sizes = [2, 32], strides = [1, 1]} : vector<2x64xf32> to vector<2x32xf32>
    %44 = arith.negf %43 : vector<2x32xf32>
    %45 = math.exp %44 : vector<2x32xf32>
    %cst_22 = arith.constant 1.000000e+00 : f32
    %46 = vector.broadcast %cst_22 : f32 to vector<2x32xf32>
    %47 = arith.addf %46, %45 : vector<2x32xf32>
    %48 = arith.divf %46, %47 : vector<2x32xf32>
    %49 = vector.extract_strided_slice %48 {offsets = [0, 0], sizes = [2, 16], strides = [1, 1]} : vector<2x32xf32> to vector<2x16xf32>
    %50 = vector.extract_strided_slice %48 {offsets = [0, 16], sizes = [2, 16], strides = [1, 1]} : vector<2x32xf32> to vector<2x16xf32>
    %51 = vector.extract_strided_slice %42 {offsets = [0, 32], sizes = [2, 16], strides = [1, 1]} : vector<2x64xf32> to vector<2x16xf32>
    %52 = math.tanh %51 : vector<2x16xf32>
    %53 = vector.extract_strided_slice %42 {offsets = [0, 48], sizes = [2, 16], strides = [1, 1]} : vector<2x64xf32> to vector<2x16xf32>
    %54 = arith.negf %53 : vector<2x16xf32>
    %55 = math.exp %54 : vector<2x16xf32>
    %cst_23 = arith.constant 1.000000e+00 : f32
    %56 = vector.broadcast %cst_23 : f32 to vector<2x16xf32>
    %57 = arith.addf %56, %55 : vector<2x16xf32>
    %58 = arith.divf %56, %57 : vector<2x16xf32>
    %59 = arith.mulf %50, %13 : vector<2x16xf32>
    %60 = arith.mulf %49, %52 : vector<2x16xf32>
    %61 = arith.addf %59, %60 : vector<2x16xf32>
    %62 = math.tanh %61 : vector<2x16xf32>
    %63 = arith.mulf %58, %62 : vector<2x16xf32>
    %64 = vector.extract_strided_slice %9 {offsets = [2, 0], sizes = [2, 128], strides = [1, 1]} : vector<16x128xf32> to vector<2x128xf32>
    %cst_24 = arith.constant dense<0.000000e+00> : vector<2x128xf32>
    %65 = tpu.matmul %37, %0, %cst_24 {dimension_numbers = #tpu.dot_dimension_numbers<[1], [0], [0], [1], [0, 0, 1, 1], [], []>} : vector<2x32xf32>, vector<32x128xf32>, vector<2x128xf32> -> vector<2x128xf32>
    %66 = arith.addf %64, %65 : vector<2x128xf32>
    %67 = vector.extract_strided_slice %66 {offsets = [0, 0], sizes = [2, 64], strides = [1, 1]} : vector<2x128xf32> to vector<2x64xf32>
    %68 = arith.negf %67 : vector<2x64xf32>
    %69 = math.exp %68 : vector<2x64xf32>
    %cst_25 = arith.constant 1.000000e+00 : f32
    %70 = vector.broadcast %cst_25 : f32 to vector<2x64xf32>
    %71 = arith.addf %70, %69 : vector<2x64xf32>
    %72 = arith.divf %70, %71 : vector<2x64xf32>
    %73 = vector.extract_strided_slice %72 {offsets = [0, 0], sizes = [2, 32], strides = [1, 1]} : vector<2x64xf32> to vector<2x32xf32>
    %74 = vector.extract_strided_slice %72 {offsets = [0, 32], sizes = [2, 32], strides = [1, 1]} : vector<2x64xf32> to vector<2x32xf32>
    %75 = vector.extract_strided_slice %66 {offsets = [0, 64], sizes = [2, 32], strides = [1, 1]} : vector<2x128xf32> to vector<2x32xf32>
    %76 = math.tanh %75 : vector<2x32xf32>
    %77 = vector.extract_strided_slice %66 {offsets = [0, 96], sizes = [2, 32], strides = [1, 1]} : vector<2x128xf32> to vector<2x32xf32>
    %78 = arith.negf %77 : vector<2x32xf32>
    %79 = math.exp %78 : vector<2x32xf32>
    %cst_26 = arith.constant 1.000000e+00 : f32
    %80 = vector.broadcast %cst_26 : f32 to vector<2x32xf32>
    %81 = arith.addf %80, %79 : vector<2x32xf32>
    %82 = arith.divf %80, %81 : vector<2x32xf32>
    %83 = arith.mulf %74, %35 : vector<2x32xf32>
    %84 = arith.mulf %73, %76 : vector<2x32xf32>
    %85 = arith.addf %83, %84 : vector<2x32xf32>
    %86 = math.tanh %85 : vector<2x32xf32>
    %87 = arith.mulf %82, %86 : vector<2x32xf32>
    %cst_27 = arith.constant dense<0.000000e+00> : vector<2x64xf32>
    %88 = tpu.matmul %87, %1, %cst_27 {dimension_numbers = #tpu.dot_dimension_numbers<[1], [0], [0], [1], [0, 0, 1, 1], [], []>} : vector<2x32xf32>, vector<32x64xf32>, vector<2x64xf32> -> vector<2x64xf32>
    %89 = vector.broadcast %3 : vector<1x64xf32> to vector<2x64xf32>
    %90 = arith.addf %88, %89 : vector<2x64xf32>
    %cst_28 = arith.constant dense<0.000000e+00> : vector<2x64xf32>
    %91 = tpu.matmul %63, %2, %cst_28 {dimension_numbers = #tpu.dot_dimension_numbers<[1], [0], [0], [1], [0, 0, 1, 1], [], []>} : vector<2x16xf32>, vector<16x64xf32>, vector<2x64xf32> -> vector<2x64xf32>
    %92 = arith.addf %90, %91 : vector<2x64xf32>
    %93 = vector.extract_strided_slice %92 {offsets = [0, 0], sizes = [2, 32], strides = [1, 1]} : vector<2x64xf32> to vector<2x32xf32>
    %94 = arith.negf %93 : vector<2x32xf32>
    %95 = math.exp %94 : vector<2x32xf32>
    %cst_29 = arith.constant 1.000000e+00 : f32
    %96 = vector.broadcast %cst_29 : f32 to vector<2x32xf32>
    %97 = arith.addf %96, %95 : vector<2x32xf32>
    %98 = arith.divf %96, %97 : vector<2x32xf32>
    %99 = vector.extract_strided_slice %98 {offsets = [0, 0], sizes = [2, 16], strides = [1, 1]} : vector<2x32xf32> to vector<2x16xf32>
    %100 = vector.extract_strided_slice %98 {offsets = [0, 16], sizes = [2, 16], strides = [1, 1]} : vector<2x32xf32> to vector<2x16xf32>
    %101 = vector.extract_strided_slice %92 {offsets = [0, 32], sizes = [2, 16], strides = [1, 1]} : vector<2x64xf32> to vector<2x16xf32>
    %102 = math.tanh %101 : vector<2x16xf32>
    %103 = vector.extract_strided_slice %92 {offsets = [0, 48], sizes = [2, 16], strides = [1, 1]} : vector<2x64xf32> to vector<2x16xf32>
    %104 = arith.negf %103 : vector<2x16xf32>
    %105 = math.exp %104 : vector<2x16xf32>
    %cst_30 = arith.constant 1.000000e+00 : f32
    %106 = vector.broadcast %cst_30 : f32 to vector<2x16xf32>
    %107 = arith.addf %106, %105 : vector<2x16xf32>
    %108 = arith.divf %106, %107 : vector<2x16xf32>
    %109 = arith.mulf %100, %61 : vector<2x16xf32>
    %110 = arith.mulf %99, %102 : vector<2x16xf32>
    %111 = arith.addf %109, %110 : vector<2x16xf32>
    %112 = math.tanh %111 : vector<2x16xf32>
    %113 = arith.mulf %108, %112 : vector<2x16xf32>
    %114 = vector.extract_strided_slice %9 {offsets = [4, 0], sizes = [2, 128], strides = [1, 1]} : vector<16x128xf32> to vector<2x128xf32>
    %cst_31 = arith.constant dense<0.000000e+00> : vector<2x128xf32>
    %115 = tpu.matmul %87, %0, %cst_31 {dimension_numbers = #tpu.dot_dimension_numbers<[1], [0], [0], [1], [0, 0, 1, 1], [], []>} : vector<2x32xf32>, vector<32x128xf32>, vector<2x128xf32> -> vector<2x128xf32>
    %116 = arith.addf %114, %115 : vector<2x128xf32>
    %117 = vector.extract_strided_slice %116 {offsets = [0, 0], sizes = [2, 64], strides = [1, 1]} : vector<2x128xf32> to vector<2x64xf32>
    %118 = arith.negf %117 : vector<2x64xf32>
    %119 = math.exp %118 : vector<2x64xf32>
    %cst_32 = arith.constant 1.000000e+00 : f32
    %120 = vector.broadcast %cst_32 : f32 to vector<2x64xf32>
    %121 = arith.addf %120, %119 : vector<2x64xf32>
    %122 = arith.divf %120, %121 : vector<2x64xf32>
    %123 = vector.extract_strided_slice %122 {offsets = [0, 0], sizes = [2, 32], strides = [1, 1]} : vector<2x64xf32> to vector<2x32xf32>
    %124 = vector.extract_strided_slice %122 {offsets = [0, 32], sizes = [2, 32], strides = [1, 1]} : vector<2x64xf32> to vector<2x32xf32>
    %125 = vector.extract_strided_slice %116 {offsets = [0, 64], sizes = [2, 32], strides = [1, 1]} : vector<2x128xf32> to vector<2x32xf32>
    %126 = math.tanh %125 : vector<2x32xf32>
    %127 = vector.extract_strided_slice %116 {offsets = [0, 96], sizes = [2, 32], strides = [1, 1]} : vector<2x128xf32> to vector<2x32xf32>
    %128 = arith.negf %127 : vector<2x32xf32>
    %129 = math.exp %128 : vector<2x32xf32>
    %cst_33 = arith.constant 1.000000e+00 : f32
    %130 = vector.broadcast %cst_33 : f32 to vector<2x32xf32>
    %131 = arith.addf %130, %129 : vector<2x32xf32>
    %132 = arith.divf %130, %131 : vector<2x32xf32>
    %133 = arith.mulf %124, %85 : vector<2x32xf32>
    %134 = arith.mulf %123, %126 : vector<2x32xf32>
    %135 = arith.addf %133, %134 : vector<2x32xf32>
    %136 = math.tanh %135 : vector<2x32xf32>
    %137 = arith.mulf %132, %136 : vector<2x32xf32>
    %cst_34 = arith.constant dense<0.000000e+00> : vector<2x64xf32>
    %138 = tpu.matmul %137, %1, %cst_34 {dimension_numbers = #tpu.dot_dimension_numbers<[1], [0], [0], [1], [0, 0, 1, 1], [], []>} : vector<2x32xf32>, vector<32x64xf32>, vector<2x64xf32> -> vector<2x64xf32>
    %139 = vector.broadcast %3 : vector<1x64xf32> to vector<2x64xf32>
    %140 = arith.addf %138, %139 : vector<2x64xf32>
    %cst_35 = arith.constant dense<0.000000e+00> : vector<2x64xf32>
    %141 = tpu.matmul %113, %2, %cst_35 {dimension_numbers = #tpu.dot_dimension_numbers<[1], [0], [0], [1], [0, 0, 1, 1], [], []>} : vector<2x16xf32>, vector<16x64xf32>, vector<2x64xf32> -> vector<2x64xf32>
    %142 = arith.addf %140, %141 : vector<2x64xf32>
    %143 = vector.extract_strided_slice %142 {offsets = [0, 0], sizes = [2, 32], strides = [1, 1]} : vector<2x64xf32> to vector<2x32xf32>
    %144 = arith.negf %143 : vector<2x32xf32>
    %145 = math.exp %144 : vector<2x32xf32>
    %cst_36 = arith.constant 1.000000e+00 : f32
    %146 = vector.broadcast %cst_36 : f32 to vector<2x32xf32>
    %147 = arith.addf %146, %145 : vector<2x32xf32>
    %148 = arith.divf %146, %147 : vector<2x32xf32>
    %149 = vector.extract_strided_slice %148 {offsets = [0, 0], sizes = [2, 16], strides = [1, 1]} : vector<2x32xf32> to vector<2x16xf32>
    %150 = vector.extract_strided_slice %148 {offsets = [0, 16], sizes = [2, 16], strides = [1, 1]} : vector<2x32xf32> to vector<2x16xf32>
    %151 = vector.extract_strided_slice %142 {offsets = [0, 32], sizes = [2, 16], strides = [1, 1]} : vector<2x64xf32> to vector<2x16xf32>
    %152 = math.tanh %151 : vector<2x16xf32>
    %153 = vector.extract_strided_slice %142 {offsets = [0, 48], sizes = [2, 16], strides = [1, 1]} : vector<2x64xf32> to vector<2x16xf32>
    %154 = arith.negf %153 : vector<2x16xf32>
    %155 = math.exp %154 : vector<2x16xf32>
    %cst_37 = arith.constant 1.000000e+00 : f32
    %156 = vector.broadcast %cst_37 : f32 to vector<2x16xf32>
    %157 = arith.addf %156, %155 : vector<2x16xf32>
    %158 = arith.divf %156, %157 : vector<2x16xf32>
    %159 = arith.mulf %150, %111 : vector<2x16xf32>
    %160 = arith.mulf %149, %152 : vector<2x16xf32>
    %161 = arith.addf %159, %160 : vector<2x16xf32>
    %162 = math.tanh %161 : vector<2x16xf32>
    %163 = arith.mulf %158, %162 : vector<2x16xf32>
    %164 = vector.extract_strided_slice %9 {offsets = [6, 0], sizes = [2, 128], strides = [1, 1]} : vector<16x128xf32> to vector<2x128xf32>
    %cst_38 = arith.constant dense<0.000000e+00> : vector<2x128xf32>
    %165 = tpu.matmul %137, %0, %cst_38 {dimension_numbers = #tpu.dot_dimension_numbers<[1], [0], [0], [1], [0, 0, 1, 1], [], []>} : vector<2x32xf32>, vector<32x128xf32>, vector<2x128xf32> -> vector<2x128xf32>
    %166 = arith.addf %164, %165 : vector<2x128xf32>
    %167 = vector.extract_strided_slice %166 {offsets = [0, 0], sizes = [2, 64], strides = [1, 1]} : vector<2x128xf32> to vector<2x64xf32>
    %168 = arith.negf %167 : vector<2x64xf32>
    %169 = math.exp %168 : vector<2x64xf32>
    %cst_39 = arith.constant 1.000000e+00 : f32
    %170 = vector.broadcast %cst_39 : f32 to vector<2x64xf32>
    %171 = arith.addf %170, %169 : vector<2x64xf32>
    %172 = arith.divf %170, %171 : vector<2x64xf32>
    %173 = vector.extract_strided_slice %172 {offsets = [0, 0], sizes = [2, 32], strides = [1, 1]} : vector<2x64xf32> to vector<2x32xf32>
    %174 = vector.extract_strided_slice %172 {offsets = [0, 32], sizes = [2, 32], strides = [1, 1]} : vector<2x64xf32> to vector<2x32xf32>
    %175 = vector.extract_strided_slice %166 {offsets = [0, 64], sizes = [2, 32], strides = [1, 1]} : vector<2x128xf32> to vector<2x32xf32>
    %176 = math.tanh %175 : vector<2x32xf32>
    %177 = vector.extract_strided_slice %166 {offsets = [0, 96], sizes = [2, 32], strides = [1, 1]} : vector<2x128xf32> to vector<2x32xf32>
    %178 = arith.negf %177 : vector<2x32xf32>
    %179 = math.exp %178 : vector<2x32xf32>
    %cst_40 = arith.constant 1.000000e+00 : f32
    %180 = vector.broadcast %cst_40 : f32 to vector<2x32xf32>
    %181 = arith.addf %180, %179 : vector<2x32xf32>
    %182 = arith.divf %180, %181 : vector<2x32xf32>
    %183 = arith.mulf %174, %135 : vector<2x32xf32>
    %184 = arith.mulf %173, %176 : vector<2x32xf32>
    %185 = arith.addf %183, %184 : vector<2x32xf32>
    %186 = math.tanh %185 : vector<2x32xf32>
    %187 = arith.mulf %182, %186 : vector<2x32xf32>
    %cst_41 = arith.constant dense<0.000000e+00> : vector<2x64xf32>
    %188 = tpu.matmul %187, %1, %cst_41 {dimension_numbers = #tpu.dot_dimension_numbers<[1], [0], [0], [1], [0, 0, 1, 1], [], []>} : vector<2x32xf32>, vector<32x64xf32>, vector<2x64xf32> -> vector<2x64xf32>
    %189 = vector.broadcast %3 : vector<1x64xf32> to vector<2x64xf32>
    %190 = arith.addf %188, %189 : vector<2x64xf32>
    %cst_42 = arith.constant dense<0.000000e+00> : vector<2x64xf32>
    %191 = tpu.matmul %163, %2, %cst_42 {dimension_numbers = #tpu.dot_dimension_numbers<[1], [0], [0], [1], [0, 0, 1, 1], [], []>} : vector<2x16xf32>, vector<16x64xf32>, vector<2x64xf32> -> vector<2x64xf32>
    %192 = arith.addf %190, %191 : vector<2x64xf32>
    %193 = vector.extract_strided_slice %192 {offsets = [0, 0], sizes = [2, 32], strides = [1, 1]} : vector<2x64xf32> to vector<2x32xf32>
    %194 = arith.negf %193 : vector<2x32xf32>
    %195 = math.exp %194 : vector<2x32xf32>
    %cst_43 = arith.constant 1.000000e+00 : f32
    %196 = vector.broadcast %cst_43 : f32 to vector<2x32xf32>
    %197 = arith.addf %196, %195 : vector<2x32xf32>
    %198 = arith.divf %196, %197 : vector<2x32xf32>
    %199 = vector.extract_strided_slice %198 {offsets = [0, 0], sizes = [2, 16], strides = [1, 1]} : vector<2x32xf32> to vector<2x16xf32>
    %200 = vector.extract_strided_slice %198 {offsets = [0, 16], sizes = [2, 16], strides = [1, 1]} : vector<2x32xf32> to vector<2x16xf32>
    %201 = vector.extract_strided_slice %192 {offsets = [0, 32], sizes = [2, 16], strides = [1, 1]} : vector<2x64xf32> to vector<2x16xf32>
    %202 = math.tanh %201 : vector<2x16xf32>
    %203 = vector.extract_strided_slice %192 {offsets = [0, 48], sizes = [2, 16], strides = [1, 1]} : vector<2x64xf32> to vector<2x16xf32>
    %204 = arith.negf %203 : vector<2x16xf32>
    %205 = math.exp %204 : vector<2x16xf32>
    %cst_44 = arith.constant 1.000000e+00 : f32
    %206 = vector.broadcast %cst_44 : f32 to vector<2x16xf32>
    %207 = arith.addf %206, %205 : vector<2x16xf32>
    %208 = arith.divf %206, %207 : vector<2x16xf32>
    %209 = arith.mulf %200, %161 : vector<2x16xf32>
    %210 = arith.mulf %199, %202 : vector<2x16xf32>
    %211 = arith.addf %209, %210 : vector<2x16xf32>
    %212 = math.tanh %211 : vector<2x16xf32>
    %213 = arith.mulf %208, %212 : vector<2x16xf32>
    %214 = vector.extract_strided_slice %9 {offsets = [8, 0], sizes = [2, 128], strides = [1, 1]} : vector<16x128xf32> to vector<2x128xf32>
    %cst_45 = arith.constant dense<0.000000e+00> : vector<2x128xf32>
    %215 = tpu.matmul %187, %0, %cst_45 {dimension_numbers = #tpu.dot_dimension_numbers<[1], [0], [0], [1], [0, 0, 1, 1], [], []>} : vector<2x32xf32>, vector<32x128xf32>, vector<2x128xf32> -> vector<2x128xf32>
    %216 = arith.addf %214, %215 : vector<2x128xf32>
    %217 = vector.extract_strided_slice %216 {offsets = [0, 0], sizes = [2, 64], strides = [1, 1]} : vector<2x128xf32> to vector<2x64xf32>
    %218 = arith.negf %217 : vector<2x64xf32>
    %219 = math.exp %218 : vector<2x64xf32>
    %cst_46 = arith.constant 1.000000e+00 : f32
    %220 = vector.broadcast %cst_46 : f32 to vector<2x64xf32>
    %221 = arith.addf %220, %219 : vector<2x64xf32>
    %222 = arith.divf %220, %221 : vector<2x64xf32>
    %223 = vector.extract_strided_slice %222 {offsets = [0, 0], sizes = [2, 32], strides = [1, 1]} : vector<2x64xf32> to vector<2x32xf32>
    %224 = vector.extract_strided_slice %222 {offsets = [0, 32], sizes = [2, 32], strides = [1, 1]} : vector<2x64xf32> to vector<2x32xf32>
    %225 = vector.extract_strided_slice %216 {offsets = [0, 64], sizes = [2, 32], strides = [1, 1]} : vector<2x128xf32> to vector<2x32xf32>
    %226 = math.tanh %225 : vector<2x32xf32>
    %227 = vector.extract_strided_slice %216 {offsets = [0, 96], sizes = [2, 32], strides = [1, 1]} : vector<2x128xf32> to vector<2x32xf32>
    %228 = arith.negf %227 : vector<2x32xf32>
    %229 = math.exp %228 : vector<2x32xf32>
    %cst_47 = arith.constant 1.000000e+00 : f32
    %230 = vector.broadcast %cst_47 : f32 to vector<2x32xf32>
    %231 = arith.addf %230, %229 : vector<2x32xf32>
    %232 = arith.divf %230, %231 : vector<2x32xf32>
    %233 = arith.mulf %224, %185 : vector<2x32xf32>
    %234 = arith.mulf %223, %226 : vector<2x32xf32>
    %235 = arith.addf %233, %234 : vector<2x32xf32>
    %236 = math.tanh %235 : vector<2x32xf32>
    %237 = arith.mulf %232, %236 : vector<2x32xf32>
    %cst_48 = arith.constant dense<0.000000e+00> : vector<2x64xf32>
    %238 = tpu.matmul %237, %1, %cst_48 {dimension_numbers = #tpu.dot_dimension_numbers<[1], [0], [0], [1], [0, 0, 1, 1], [], []>} : vector<2x32xf32>, vector<32x64xf32>, vector<2x64xf32> -> vector<2x64xf32>
    %239 = vector.broadcast %3 : vector<1x64xf32> to vector<2x64xf32>
    %240 = arith.addf %238, %239 : vector<2x64xf32>
    %cst_49 = arith.constant dense<0.000000e+00> : vector<2x64xf32>
    %241 = tpu.matmul %213, %2, %cst_49 {dimension_numbers = #tpu.dot_dimension_numbers<[1], [0], [0], [1], [0, 0, 1, 1], [], []>} : vector<2x16xf32>, vector<16x64xf32>, vector<2x64xf32> -> vector<2x64xf32>
    %242 = arith.addf %240, %241 : vector<2x64xf32>
    %243 = vector.extract_strided_slice %242 {offsets = [0, 0], sizes = [2, 32], strides = [1, 1]} : vector<2x64xf32> to vector<2x32xf32>
    %244 = arith.negf %243 : vector<2x32xf32>
    %245 = math.exp %244 : vector<2x32xf32>
    %cst_50 = arith.constant 1.000000e+00 : f32
    %246 = vector.broadcast %cst_50 : f32 to vector<2x32xf32>
    %247 = arith.addf %246, %245 : vector<2x32xf32>
    %248 = arith.divf %246, %247 : vector<2x32xf32>
    %249 = vector.extract_strided_slice %248 {offsets = [0, 0], sizes = [2, 16], strides = [1, 1]} : vector<2x32xf32> to vector<2x16xf32>
    %250 = vector.extract_strided_slice %248 {offsets = [0, 16], sizes = [2, 16], strides = [1, 1]} : vector<2x32xf32> to vector<2x16xf32>
    %251 = vector.extract_strided_slice %242 {offsets = [0, 32], sizes = [2, 16], strides = [1, 1]} : vector<2x64xf32> to vector<2x16xf32>
    %252 = math.tanh %251 : vector<2x16xf32>
    %253 = vector.extract_strided_slice %242 {offsets = [0, 48], sizes = [2, 16], strides = [1, 1]} : vector<2x64xf32> to vector<2x16xf32>
    %254 = arith.negf %253 : vector<2x16xf32>
    %255 = math.exp %254 : vector<2x16xf32>
    %cst_51 = arith.constant 1.000000e+00 : f32
    %256 = vector.broadcast %cst_51 : f32 to vector<2x16xf32>
    %257 = arith.addf %256, %255 : vector<2x16xf32>
    %258 = arith.divf %256, %257 : vector<2x16xf32>
    %259 = arith.mulf %250, %211 : vector<2x16xf32>
    %260 = arith.mulf %249, %252 : vector<2x16xf32>
    %261 = arith.addf %259, %260 : vector<2x16xf32>
    %262 = math.tanh %261 : vector<2x16xf32>
    %263 = arith.mulf %258, %262 : vector<2x16xf32>
    %264 = vector.extract_strided_slice %9 {offsets = [10, 0], sizes = [2, 128], strides = [1, 1]} : vector<16x128xf32> to vector<2x128xf32>
    %cst_52 = arith.constant dense<0.000000e+00> : vector<2x128xf32>
    %265 = tpu.matmul %237, %0, %cst_52 {dimension_numbers = #tpu.dot_dimension_numbers<[1], [0], [0], [1], [0, 0, 1, 1], [], []>} : vector<2x32xf32>, vector<32x128xf32>, vector<2x128xf32> -> vector<2x128xf32>
    %266 = arith.addf %264, %265 : vector<2x128xf32>
    %267 = vector.extract_strided_slice %266 {offsets = [0, 0], sizes = [2, 64], strides = [1, 1]} : vector<2x128xf32> to vector<2x64xf32>
    %268 = arith.negf %267 : vector<2x64xf32>
    %269 = math.exp %268 : vector<2x64xf32>
    %cst_53 = arith.constant 1.000000e+00 : f32
    %270 = vector.broadcast %cst_53 : f32 to vector<2x64xf32>
    %271 = arith.addf %270, %269 : vector<2x64xf32>
    %272 = arith.divf %270, %271 : vector<2x64xf32>
    %273 = vector.extract_strided_slice %272 {offsets = [0, 0], sizes = [2, 32], strides = [1, 1]} : vector<2x64xf32> to vector<2x32xf32>
    %274 = vector.extract_strided_slice %272 {offsets = [0, 32], sizes = [2, 32], strides = [1, 1]} : vector<2x64xf32> to vector<2x32xf32>
    %275 = vector.extract_strided_slice %266 {offsets = [0, 64], sizes = [2, 32], strides = [1, 1]} : vector<2x128xf32> to vector<2x32xf32>
    %276 = math.tanh %275 : vector<2x32xf32>
    %277 = vector.extract_strided_slice %266 {offsets = [0, 96], sizes = [2, 32], strides = [1, 1]} : vector<2x128xf32> to vector<2x32xf32>
    %278 = arith.negf %277 : vector<2x32xf32>
    %279 = math.exp %278 : vector<2x32xf32>
    %cst_54 = arith.constant 1.000000e+00 : f32
    %280 = vector.broadcast %cst_54 : f32 to vector<2x32xf32>
    %281 = arith.addf %280, %279 : vector<2x32xf32>
    %282 = arith.divf %280, %281 : vector<2x32xf32>
    %283 = arith.mulf %274, %235 : vector<2x32xf32>
    %284 = arith.mulf %273, %276 : vector<2x32xf32>
    %285 = arith.addf %283, %284 : vector<2x32xf32>
    %286 = math.tanh %285 : vector<2x32xf32>
    %287 = arith.mulf %282, %286 : vector<2x32xf32>
    %cst_55 = arith.constant dense<0.000000e+00> : vector<2x64xf32>
    %288 = tpu.matmul %287, %1, %cst_55 {dimension_numbers = #tpu.dot_dimension_numbers<[1], [0], [0], [1], [0, 0, 1, 1], [], []>} : vector<2x32xf32>, vector<32x64xf32>, vector<2x64xf32> -> vector<2x64xf32>
    %289 = vector.broadcast %3 : vector<1x64xf32> to vector<2x64xf32>
    %290 = arith.addf %288, %289 : vector<2x64xf32>
    %cst_56 = arith.constant dense<0.000000e+00> : vector<2x64xf32>
    %291 = tpu.matmul %263, %2, %cst_56 {dimension_numbers = #tpu.dot_dimension_numbers<[1], [0], [0], [1], [0, 0, 1, 1], [], []>} : vector<2x16xf32>, vector<16x64xf32>, vector<2x64xf32> -> vector<2x64xf32>
    %292 = arith.addf %290, %291 : vector<2x64xf32>
    %293 = vector.extract_strided_slice %292 {offsets = [0, 0], sizes = [2, 32], strides = [1, 1]} : vector<2x64xf32> to vector<2x32xf32>
    %294 = arith.negf %293 : vector<2x32xf32>
    %295 = math.exp %294 : vector<2x32xf32>
    %cst_57 = arith.constant 1.000000e+00 : f32
    %296 = vector.broadcast %cst_57 : f32 to vector<2x32xf32>
    %297 = arith.addf %296, %295 : vector<2x32xf32>
    %298 = arith.divf %296, %297 : vector<2x32xf32>
    %299 = vector.extract_strided_slice %298 {offsets = [0, 0], sizes = [2, 16], strides = [1, 1]} : vector<2x32xf32> to vector<2x16xf32>
    %300 = vector.extract_strided_slice %298 {offsets = [0, 16], sizes = [2, 16], strides = [1, 1]} : vector<2x32xf32> to vector<2x16xf32>
    %301 = vector.extract_strided_slice %292 {offsets = [0, 32], sizes = [2, 16], strides = [1, 1]} : vector<2x64xf32> to vector<2x16xf32>
    %302 = math.tanh %301 : vector<2x16xf32>
    %303 = vector.extract_strided_slice %292 {offsets = [0, 48], sizes = [2, 16], strides = [1, 1]} : vector<2x64xf32> to vector<2x16xf32>
    %304 = arith.negf %303 : vector<2x16xf32>
    %305 = math.exp %304 : vector<2x16xf32>
    %cst_58 = arith.constant 1.000000e+00 : f32
    %306 = vector.broadcast %cst_58 : f32 to vector<2x16xf32>
    %307 = arith.addf %306, %305 : vector<2x16xf32>
    %308 = arith.divf %306, %307 : vector<2x16xf32>
    %309 = arith.mulf %300, %261 : vector<2x16xf32>
    %310 = arith.mulf %299, %302 : vector<2x16xf32>
    %311 = arith.addf %309, %310 : vector<2x16xf32>
    %312 = math.tanh %311 : vector<2x16xf32>
    %313 = arith.mulf %308, %312 : vector<2x16xf32>
    %314 = vector.extract_strided_slice %9 {offsets = [12, 0], sizes = [2, 128], strides = [1, 1]} : vector<16x128xf32> to vector<2x128xf32>
    %cst_59 = arith.constant dense<0.000000e+00> : vector<2x128xf32>
    %315 = tpu.matmul %287, %0, %cst_59 {dimension_numbers = #tpu.dot_dimension_numbers<[1], [0], [0], [1], [0, 0, 1, 1], [], []>} : vector<2x32xf32>, vector<32x128xf32>, vector<2x128xf32> -> vector<2x128xf32>
    %316 = arith.addf %314, %315 : vector<2x128xf32>
    %317 = vector.extract_strided_slice %316 {offsets = [0, 0], sizes = [2, 64], strides = [1, 1]} : vector<2x128xf32> to vector<2x64xf32>
    %318 = arith.negf %317 : vector<2x64xf32>
    %319 = math.exp %318 : vector<2x64xf32>
    %cst_60 = arith.constant 1.000000e+00 : f32
    %320 = vector.broadcast %cst_60 : f32 to vector<2x64xf32>
    %321 = arith.addf %320, %319 : vector<2x64xf32>
    %322 = arith.divf %320, %321 : vector<2x64xf32>
    %323 = vector.extract_strided_slice %322 {offsets = [0, 0], sizes = [2, 32], strides = [1, 1]} : vector<2x64xf32> to vector<2x32xf32>
    %324 = vector.extract_strided_slice %322 {offsets = [0, 32], sizes = [2, 32], strides = [1, 1]} : vector<2x64xf32> to vector<2x32xf32>
    %325 = vector.extract_strided_slice %316 {offsets = [0, 64], sizes = [2, 32], strides = [1, 1]} : vector<2x128xf32> to vector<2x32xf32>
    %326 = math.tanh %325 : vector<2x32xf32>
    %327 = vector.extract_strided_slice %316 {offsets = [0, 96], sizes = [2, 32], strides = [1, 1]} : vector<2x128xf32> to vector<2x32xf32>
    %328 = arith.negf %327 : vector<2x32xf32>
    %329 = math.exp %328 : vector<2x32xf32>
    %cst_61 = arith.constant 1.000000e+00 : f32
    %330 = vector.broadcast %cst_61 : f32 to vector<2x32xf32>
    %331 = arith.addf %330, %329 : vector<2x32xf32>
    %332 = arith.divf %330, %331 : vector<2x32xf32>
    %333 = arith.mulf %324, %285 : vector<2x32xf32>
    %334 = arith.mulf %323, %326 : vector<2x32xf32>
    %335 = arith.addf %333, %334 : vector<2x32xf32>
    %336 = math.tanh %335 : vector<2x32xf32>
    %337 = arith.mulf %332, %336 : vector<2x32xf32>
    %cst_62 = arith.constant dense<0.000000e+00> : vector<2x64xf32>
    %338 = tpu.matmul %337, %1, %cst_62 {dimension_numbers = #tpu.dot_dimension_numbers<[1], [0], [0], [1], [0, 0, 1, 1], [], []>} : vector<2x32xf32>, vector<32x64xf32>, vector<2x64xf32> -> vector<2x64xf32>
    %339 = vector.broadcast %3 : vector<1x64xf32> to vector<2x64xf32>
    %340 = arith.addf %338, %339 : vector<2x64xf32>
    %cst_63 = arith.constant dense<0.000000e+00> : vector<2x64xf32>
    %341 = tpu.matmul %313, %2, %cst_63 {dimension_numbers = #tpu.dot_dimension_numbers<[1], [0], [0], [1], [0, 0, 1, 1], [], []>} : vector<2x16xf32>, vector<16x64xf32>, vector<2x64xf32> -> vector<2x64xf32>
    %342 = arith.addf %340, %341 : vector<2x64xf32>
    %343 = vector.extract_strided_slice %342 {offsets = [0, 0], sizes = [2, 32], strides = [1, 1]} : vector<2x64xf32> to vector<2x32xf32>
    %344 = arith.negf %343 : vector<2x32xf32>
    %345 = math.exp %344 : vector<2x32xf32>
    %cst_64 = arith.constant 1.000000e+00 : f32
    %346 = vector.broadcast %cst_64 : f32 to vector<2x32xf32>
    %347 = arith.addf %346, %345 : vector<2x32xf32>
    %348 = arith.divf %346, %347 : vector<2x32xf32>
    %349 = vector.extract_strided_slice %348 {offsets = [0, 0], sizes = [2, 16], strides = [1, 1]} : vector<2x32xf32> to vector<2x16xf32>
    %350 = vector.extract_strided_slice %348 {offsets = [0, 16], sizes = [2, 16], strides = [1, 1]} : vector<2x32xf32> to vector<2x16xf32>
    %351 = vector.extract_strided_slice %342 {offsets = [0, 32], sizes = [2, 16], strides = [1, 1]} : vector<2x64xf32> to vector<2x16xf32>
    %352 = math.tanh %351 : vector<2x16xf32>
    %353 = vector.extract_strided_slice %342 {offsets = [0, 48], sizes = [2, 16], strides = [1, 1]} : vector<2x64xf32> to vector<2x16xf32>
    %354 = arith.negf %353 : vector<2x16xf32>
    %355 = math.exp %354 : vector<2x16xf32>
    %cst_65 = arith.constant 1.000000e+00 : f32
    %356 = vector.broadcast %cst_65 : f32 to vector<2x16xf32>
    %357 = arith.addf %356, %355 : vector<2x16xf32>
    %358 = arith.divf %356, %357 : vector<2x16xf32>
    %359 = arith.mulf %350, %311 : vector<2x16xf32>
    %360 = arith.mulf %349, %352 : vector<2x16xf32>
    %361 = arith.addf %359, %360 : vector<2x16xf32>
    %362 = math.tanh %361 : vector<2x16xf32>
    %363 = arith.mulf %358, %362 : vector<2x16xf32>
    %364 = vector.extract_strided_slice %9 {offsets = [14, 0], sizes = [2, 128], strides = [1, 1]} : vector<16x128xf32> to vector<2x128xf32>
    %cst_66 = arith.constant dense<0.000000e+00> : vector<2x128xf32>
    %365 = tpu.matmul %337, %0, %cst_66 {dimension_numbers = #tpu.dot_dimension_numbers<[1], [0], [0], [1], [0, 0, 1, 1], [], []>} : vector<2x32xf32>, vector<32x128xf32>, vector<2x128xf32> -> vector<2x128xf32>
    %366 = arith.addf %364, %365 : vector<2x128xf32>
    %367 = vector.extract_strided_slice %366 {offsets = [0, 0], sizes = [2, 64], strides = [1, 1]} : vector<2x128xf32> to vector<2x64xf32>
    %368 = arith.negf %367 : vector<2x64xf32>
    %369 = math.exp %368 : vector<2x64xf32>
    %cst_67 = arith.constant 1.000000e+00 : f32
    %370 = vector.broadcast %cst_67 : f32 to vector<2x64xf32>
    %371 = arith.addf %370, %369 : vector<2x64xf32>
    %372 = arith.divf %370, %371 : vector<2x64xf32>
    %373 = vector.extract_strided_slice %372 {offsets = [0, 0], sizes = [2, 32], strides = [1, 1]} : vector<2x64xf32> to vector<2x32xf32>
    %374 = vector.extract_strided_slice %372 {offsets = [0, 32], sizes = [2, 32], strides = [1, 1]} : vector<2x64xf32> to vector<2x32xf32>
    %375 = vector.extract_strided_slice %366 {offsets = [0, 64], sizes = [2, 32], strides = [1, 1]} : vector<2x128xf32> to vector<2x32xf32>
    %376 = math.tanh %375 : vector<2x32xf32>
    %377 = vector.extract_strided_slice %366 {offsets = [0, 96], sizes = [2, 32], strides = [1, 1]} : vector<2x128xf32> to vector<2x32xf32>
    %378 = arith.negf %377 : vector<2x32xf32>
    %379 = math.exp %378 : vector<2x32xf32>
    %cst_68 = arith.constant 1.000000e+00 : f32
    %380 = vector.broadcast %cst_68 : f32 to vector<2x32xf32>
    %381 = arith.addf %380, %379 : vector<2x32xf32>
    %382 = arith.divf %380, %381 : vector<2x32xf32>
    %383 = arith.mulf %374, %335 : vector<2x32xf32>
    %384 = arith.mulf %373, %376 : vector<2x32xf32>
    %385 = arith.addf %383, %384 : vector<2x32xf32>
    %386 = math.tanh %385 : vector<2x32xf32>
    %387 = arith.mulf %382, %386 : vector<2x32xf32>
    %cst_69 = arith.constant dense<0.000000e+00> : vector<2x64xf32>
    %388 = tpu.matmul %387, %1, %cst_69 {dimension_numbers = #tpu.dot_dimension_numbers<[1], [0], [0], [1], [0, 0, 1, 1], [], []>} : vector<2x32xf32>, vector<32x64xf32>, vector<2x64xf32> -> vector<2x64xf32>
    %389 = vector.broadcast %3 : vector<1x64xf32> to vector<2x64xf32>
    %390 = arith.addf %388, %389 : vector<2x64xf32>
    %cst_70 = arith.constant dense<0.000000e+00> : vector<2x64xf32>
    %391 = tpu.matmul %363, %2, %cst_70 {dimension_numbers = #tpu.dot_dimension_numbers<[1], [0], [0], [1], [0, 0, 1, 1], [], []>} : vector<2x16xf32>, vector<16x64xf32>, vector<2x64xf32> -> vector<2x64xf32>
    %392 = arith.addf %390, %391 : vector<2x64xf32>
    %393 = vector.extract_strided_slice %392 {offsets = [0, 0], sizes = [2, 32], strides = [1, 1]} : vector<2x64xf32> to vector<2x32xf32>
    %394 = arith.negf %393 : vector<2x32xf32>
    %395 = math.exp %394 : vector<2x32xf32>
    %cst_71 = arith.constant 1.000000e+00 : f32
    %396 = vector.broadcast %cst_71 : f32 to vector<2x32xf32>
    %397 = arith.addf %396, %395 : vector<2x32xf32>
    %398 = arith.divf %396, %397 : vector<2x32xf32>
    %399 = vector.extract_strided_slice %398 {offsets = [0, 0], sizes = [2, 16], strides = [1, 1]} : vector<2x32xf32> to vector<2x16xf32>
    %400 = vector.extract_strided_slice %398 {offsets = [0, 16], sizes = [2, 16], strides = [1, 1]} : vector<2x32xf32> to vector<2x16xf32>
    %401 = vector.extract_strided_slice %392 {offsets = [0, 32], sizes = [2, 16], strides = [1, 1]} : vector<2x64xf32> to vector<2x16xf32>
    %402 = math.tanh %401 : vector<2x16xf32>
    %403 = vector.extract_strided_slice %392 {offsets = [0, 48], sizes = [2, 16], strides = [1, 1]} : vector<2x64xf32> to vector<2x16xf32>
    %404 = arith.negf %403 : vector<2x16xf32>
    %405 = math.exp %404 : vector<2x16xf32>
    %cst_72 = arith.constant 1.000000e+00 : f32
    %406 = vector.broadcast %cst_72 : f32 to vector<2x16xf32>
    %407 = arith.addf %406, %405 : vector<2x16xf32>
    %408 = arith.divf %406, %407 : vector<2x16xf32>
    %409 = arith.mulf %400, %361 : vector<2x16xf32>
    %410 = arith.mulf %399, %402 : vector<2x16xf32>
    %411 = arith.addf %409, %410 : vector<2x16xf32>
    %412 = math.tanh %411 : vector<2x16xf32>
    %413 = arith.mulf %408, %412 : vector<2x16xf32>
    %c0_73 = arith.constant 0 : index
    %c0_74 = arith.constant 0 : index
    %414 = vector.load %arg7[%c0_73, %c0_74] : memref<32x128xf32, #tpu.memory_space<vmem>>, vector<32x128xf32>
    %cst_75 = arith.constant dense<0.000000e+00> : vector<2x128xf32>
    %415 = tpu.matmul %387, %414, %cst_75 {dimension_numbers = #tpu.dot_dimension_numbers<[1], [0], [0], [1], [0, 0, 1, 1], [], []>} : vector<2x32xf32>, vector<32x128xf32>, vector<2x128xf32> -> vector<2x128xf32>
    %c0_76 = arith.constant 0 : index
    %c0_77 = arith.constant 0 : index
    %416 = vector.load %arg8[%c0_76, %c0_77] : memref<1x128xf32, #tpu.memory_space<vmem>>, vector<1x128xf32>
    %417 = vector.broadcast %416 : vector<1x128xf32> to vector<2x128xf32>
    %418 = arith.addf %415, %417 : vector<2x128xf32>
    %c0_78 = arith.constant 0 : index
    %c0_79 = arith.constant 0 : index
    %419 = vector.load %arg9[%c0_78, %c0_79] : memref<2x128xf32, #tpu.memory_space<vmem>>, vector<2x128xf32>
    tpu.vector_store %arg9[%c0_78, %c0_79], %418 {strides = array<i32>} : memref<2x128xf32, #tpu.memory_space<vmem>>, vector<2x128xf32>,
    %420 = tpu.concatenate %63, %113, %163, %213, %263, %313, %363, %413 in 1 : vector<2x16xf32>, vector<2x16xf32>, vector<2x16xf32>, vector<2x16xf32>, vector<2x16xf32>, vector<2x16xf32>, vector<2x16xf32>, vector<2x16xf32> -> vector<2x128xf32>
    %c0_80 = arith.constant 0 : index
    %c0_81 = arith.constant 0 : index
    %421 = vector.load %arg10[%c0_80, %c0_81] : memref<2x128xf32, #tpu.memory_space<vmem>>, vector<2x128xf32>
    tpu.vector_store %arg10[%c0_80, %c0_81], %420 {strides = array<i32>} : memref<2x128xf32, #tpu.memory_space<vmem>>, vector<2x128xf32>,
    return
  }
}

</mosaic_0001>

<llo_original>
// kernel: lstm_autoencoder_forward.1
$region0: #{lstm_autoencoder_forward.1}
  #allocation0 [shape = 'u32[]', space=smem, size = 0x4, offset = 0x4, fixed_abs, tag = 'smem constant byte address 0x4 - core index']
  #allocation1 [shape = 'u32[144,128]{1,0:T(1,128)}', space=vmem, size = 0x12000, scoped, tag = 'internal scratch']
  %s0 = inlined_call_operand.vmem [shape: f32[16,16], index: 0, kind: input, shape index: {}]
  %s1 = inlined_call_operand.vmem [shape: f32[16,128], index: 1, kind: input, shape index: {}]
  %s2 = inlined_call_operand.vmem [shape: f32[32,128], index: 2, kind: input, shape index: {}]
  %s3 = inlined_call_operand.vmem [shape: f32[1,128], index: 3, kind: input, shape index: {}]
  %s4 = inlined_call_operand.vmem [shape: f32[32,64], index: 4, kind: input, shape index: {}]
  %s5 = inlined_call_operand.vmem [shape: f32[16,64], index: 5, kind: input, shape index: {}]
  %s6 = inlined_call_operand.vmem [shape: f32[1,64], index: 6, kind: input, shape index: {}]
  %s7 = inlined_call_operand.vmem [shape: f32[32,128], index: 7, kind: input, shape index: {}]
  %s8 = inlined_call_operand.vmem [shape: f32[1,128], index: 8, kind: input, shape index: {}]
  %s9 = inlined_call_operand.hbm [shape: f32[2,128], index: 9, kind: output, shape index: {0}]
  %s10 = inlined_call_operand.vmem [shape: f32[2,128], index: 10, kind: output, shape index: {1}]
  %11 = xla_tuple %s9, %s10
  %s12 = sld [smem:[#allocation0]]
  $region54: #{lstm_autoencoder_forward.1} parent=0
    _
  %s14 = ssub.s32 1, %s12
  %s15 = scalar_select 0, %s14, %s12
  $region1: #{lstm_autoencoder_forward.1} parent=0
    #allocation2 [shape = 'u8[1024]{0}', space=vmem, size = 0x400, scoped, tag = 'output window, operand 0, single buffered']
    #allocation3 [shape = 's32[1]{0}', space=sflag, size = 0x4, scoped, tag = 'scoped memory for lstm_autoencoder_forward.1']
    %16 = vsyncpa [#allocation3], 0
    // Predicated region
    $region2: #{lstm_autoencoder_forward.1} parent=1 // pred_check
      _
    $region3: #{lstm_autoencoder_forward.1} parent=1 // pred_check_branch
      %18 = sbr.rel (0) target = $region5
    $region4: #{lstm_autoencoder_forward.1} parent=1 // pred_region
      _
    $region5: #{lstm_autoencoder_forward.1} parent=1 // pred_fallthru
      _
    // Predicated region
    $region6: #{lstm_autoencoder_forward.1} parent=1 // pred_check
      _
    $region7: #{lstm_autoencoder_forward.1} parent=1 // pred_check_branch
      %20 = sbr.rel (0) target = $region9
    $region8: #{lstm_autoencoder_forward.1} parent=1 // pred_region
      _
    $region9: #{lstm_autoencoder_forward.1} parent=1 // pred_fallthru
      _
    // Predicated region
    $region10: #{lstm_autoencoder_forward.1} parent=1 // pred_check
      _
    $region11: #{lstm_autoencoder_forward.1} parent=1 // pred_check_branch
      %22 = sbr.rel (0) target = $region13
    $region12: #{lstm_autoencoder_forward.1} parent=1 // pred_region
      _
    $region13: #{lstm_autoencoder_forward.1} parent=1 // pred_fallthru
      _
    // Predicated region
    $region14: #{lstm_autoencoder_forward.1} parent=1 // pred_check
      _
    $region15: #{lstm_autoencoder_forward.1} parent=1 // pred_check_branch
      %24 = sbr.rel (0) target = $region17
    $region16: #{lstm_autoencoder_forward.1} parent=1 // pred_region
      _
    $region17: #{lstm_autoencoder_forward.1} parent=1 // pred_fallthru
      _
    // Predicated region
    $region18: #{lstm_autoencoder_forward.1} parent=1 // pred_check
      _
    $region19: #{lstm_autoencoder_forward.1} parent=1 // pred_check_branch
      %26 = sbr.rel (0) target = $region21
    $region20: #{lstm_autoencoder_forward.1} parent=1 // pred_region
      _
    $region21: #{lstm_autoencoder_forward.1} parent=1 // pred_fallthru
      _
    // Predicated region
    $region22: #{lstm_autoencoder_forward.1} parent=1 // pred_check
      _
    $region23: #{lstm_autoencoder_forward.1} parent=1 // pred_check_branch
      %28 = sbr.rel (0) target = $region25
    $region24: #{lstm_autoencoder_forward.1} parent=1 // pred_region
      _
    $region25: #{lstm_autoencoder_forward.1} parent=1 // pred_fallthru
      _
    // Predicated region
    $region26: #{lstm_autoencoder_forward.1} parent=1 // pred_check
      _
    $region27: #{lstm_autoencoder_forward.1} parent=1 // pred_check_branch
      %30 = sbr.rel (0) target = $region29
    $region28: #{lstm_autoencoder_forward.1} parent=1 // pred_region
      _
    $region29: #{lstm_autoencoder_forward.1} parent=1 // pred_fallthru
      _
    // Predicated region
    $region30: #{lstm_autoencoder_forward.1} parent=1 // pred_check
      _
    $region31: #{lstm_autoencoder_forward.1} parent=1 // pred_check_branch
      %32 = sbr.rel (0) target = $region33
    $region32: #{lstm_autoencoder_forward.1} parent=1 // pred_region
      _
    $region33: #{lstm_autoencoder_forward.1} parent=1 // pred_fallthru
      _
    // Predicated region
    $region34: #{lstm_autoencoder_forward.1} parent=1 // pred_check
      _
    $region35: #{lstm_autoencoder_forward.1} parent=1 // pred_check_branch
      %34 = sbr.rel (0) target = $region37
    $region36: #{lstm_autoencoder_forward.1} parent=1 // pred_region
      _
    $region37: #{lstm_autoencoder_forward.1} parent=1 // pred_fallthru
      _
    %v35 = vld [vmem:[%s2] sm:$0xff]
    %v36 = vld [vmem:[%s2 + $0x8] sm:$0xff]
    %v37 = vld [vmem:[%s2 + $0x10] sm:$0xff]
    %v38 = vld [vmem:[%s2 + $0x18] sm:$0xff]
    %v39 = vld [vmem:[%s4] sm:$0xff]
    %v40 = vld [vmem:[%s4 + $0x8] sm:$0xff]
    %v41 = vld [vmem:[%s4 + $0x10] sm:$0xff]
    %v42 = vld [vmem:[%s4 + $0x18] sm:$0xff]
    %v43 = vld [vmem:[%s5] sm:$0xff]
    %v44 = vld [vmem:[%s5 + $0x8] sm:$0xff]
    %v45 = vld [vmem:[%s6] sm:$0x1]
    %v46 = vld [vmem:[%s0] sm:$0xff]
    %v47 = vld [vmem:[%s0 + $0x8] sm:$0xff]
    %v48 = vld [vmem:[%s1] sm:$0xff]
    %v49 = vld [vmem:[%s1 + $0x8] sm:$0xff]
    %v50 = vld [vmem:[%s3] sm:$0x1]
    %v52 = vlaneseq
    %v53 = vshrl.u32 %v52, 7
    %v54 = vsub.s32 0, %v53
    %v55 = vrot.slane %v50, %v54
    %vm57 = vcmask 130048
    %v59 = vsel %vm57, %v46, 0
    %v62 = vsel %vm57, %v47, 0
    %64 = vmatprep.subr.mxu0 0.0
    %65 = vmatpush1.msra.mxu0 %v48
    %66 = vmatprep.subr.mxu0 0.0
    %67 = vmatpush1.msra.mxu0 %v49
    %68 = vmatprep.subr.mxu0 0.0
    %69 = vmatpush1.msra.mxu0 0.0
    %70 = vmatprep.subr.mxu0 0.0
    %71 = vmatpush1.msra.mxu0 0.0
    %72 = vmatprep.subr.mxu0 0.0
    %73 = vmatpush1.msra.mxu0 0.0
    %74 = vmatprep.subr.mxu0 0.0
    %75 = vmatpush1.msra.mxu0 0.0
    %76 = vmatprep.subr.mxu0 0.0
    %77 = vmatpush1.msra.mxu0 0.0
    %78 = vmatprep.subr.mxu0 0.0
    %79 = vmatpush1.msra.mxu0 0.0
    %80 = vmatprep.subr.mxu0 0.0
    %81 = vmatpush1.msra.mxu0 0.0
    %82 = vmatprep.subr.mxu0 0.0
    %83 = vmatpush1.msra.mxu0 0.0
    %84 = vmatprep.subr.mxu0 0.0
    %85 = vmatpush1.msra.mxu0 0.0
    %86 = vmatprep.subr.mxu0 0.0
    %87 = vmatpush1.msra.mxu0 0.0
    %88 = vmatprep.subr.mxu0 0.0
    %89 = vmatpush1.msra.mxu0 0.0
    %90 = vmatprep.subr.mxu0 0.0
    %91 = vmatpush1.msra.mxu0 0.0
    %92 = vmatprep.subr.mxu0 0.0
    %93 = vmatpush1.msra.mxu0 0.0
    %94 = vmatprep.subr.mxu0 0.0
    %95 = vmatpush1.msra.mxu0 0.0
    %96 = vmatprep.subr.mxu0 0.0
    %97 = vmatpush1.msra.mxu0 0.0
    %98 = vmatprep.subr.mxu0 0.0
    %99 = vmatpush1.msra.mxu0 0.0
    %100 = vmatprep.subr.mxu0 0.0
    %101 = vmatpush1.msra.mxu0 0.0
    %102 = vmatprep.subr.mxu0 0.0
    %103 = vmatpush1.msra.mxu0 0.0
    %104 = vmatprep.subr.mxu0 0.0
    %105 = vmatpush1.msra.mxu0 0.0
    %106 = vmatprep.subr.mxu0 0.0
    %107 = vmatpush1.msra.mxu0 0.0
    %108 = vmatprep.subr.mxu0 0.0
    %109 = vmatpush1.msra.mxu0 0.0
    %110 = vmatprep.subr.mxu0 0.0
    %111 = vmatpush1.msra.mxu0 0.0
    %112 = vmatprep.subr.mxu0 0.0
    %113 = vmatpush1.msra.mxu0 0.0
    %114 = vmatprep.subr.mxu0 0.0
    %115 = vmatpush1.msra.mxu0 0.0
    %116 = vmatprep.subr.mxu0 0.0
    %117 = vmatpush1.msra.mxu0 0.0
    %118 = vmatprep.subr.mxu0 0.0
    %119 = vmatpush1.msra.mxu0 0.0
    %120 = vmatprep.subr.mxu0 0.0
    %121 = vmatpush1.msra.mxu0 0.0
    %122 = vmatprep.subr.mxu0 0.0
    %123 = vmatpush1.msra.mxu0 0.0
    %124 = vmatprep.subr.mxu0 0.0
    %125 = vmatpush1.msra.mxu0 0.0
    %126 = vmatprep.subr.mxu0 0.0
    %127 = vmatpush1.msra.mxu0 0.0
    %128 = vmatprep.mubr.f32.mxu0 0.0
    %129 = vmatmul.mubr.f32.gmra.mrb[0].mxu0 %v59
    %v130 = vpop.f32.mrb[0].mxu0
    %v131 = vadd.f32 %v55, %v130
    %v132 = vpop.f32.mrb[0].mxu0
    %133 = vmatprep.mubr.f32.mxu0 0.0
    %134 = vmatmul.mubr.f32.gmra.mrb[0].mxu0 %v62
    %v135 = vpop.f32.mrb[0].mxu0
    %v136 = vadd.f32 %v55, %v135
    %v137 = vpop.f32.mrb[0].mxu0
    %138 = vdwg.mxu0
    %vm139 = vcmask 261120
    %v141 = vsel %vm139, 0.0, 0
    %143 = vmatprep.subr.mxu0 0.0
    %144 = vmatpush1.msra.mxu0 %v35
    %145 = vmatprep.subr.mxu0 0.0
    %146 = vmatpush1.msra.mxu0 %v36
    %147 = vmatprep.subr.mxu0 0.0
    %148 = vmatpush1.msra.mxu0 %v37
    %149 = vmatprep.subr.mxu0 0.0
    %150 = vmatpush1.msra.mxu0 %v38
    %151 = vmatprep.subr.mxu0 0.0
    %152 = vmatpush1.msra.mxu0 0.0
    %153 = vmatprep.subr.mxu0 0.0
    %154 = vmatpush1.msra.mxu0 0.0
    %155 = vmatprep.subr.mxu0 0.0
    %156 = vmatpush1.msra.mxu0 0.0
    %157 = vmatprep.subr.mxu0 0.0
    %158 = vmatpush1.msra.mxu0 0.0
    %159 = vmatprep.subr.mxu0 0.0
    %160 = vmatpush1.msra.mxu0 0.0
    %161 = vmatprep.subr.mxu0 0.0
    %162 = vmatpush1.msra.mxu0 0.0
    %163 = vmatprep.subr.mxu0 0.0
    %164 = vmatpush1.msra.mxu0 0.0
    %165 = vmatprep.subr.mxu0 0.0
    %166 = vmatpush1.msra.mxu0 0.0
    %167 = vmatprep.subr.mxu0 0.0
    %168 = vmatpush1.msra.mxu0 0.0
    %169 = vmatprep.subr.mxu0 0.0
    %170 = vmatpush1.msra.mxu0 0.0
    %171 = vmatprep.subr.mxu0 0.0
    %172 = vmatpush1.msra.mxu0 0.0
    %173 = vmatprep.subr.mxu0 0.0
    %174 = vmatpush1.msra.mxu0 0.0
    %175 = vmatprep.subr.mxu0 0.0
    %176 = vmatpush1.msra.mxu0 0.0
    %177 = vmatprep.subr.mxu0 0.0
    %178 = vmatpush1.msra.mxu0 0.0
    %179 = vmatprep.subr.mxu0 0.0
    %180 = vmatpush1.msra.mxu0 0.0
    %181 = vmatprep.subr.mxu0 0.0
    %182 = vmatpush1.msra.mxu0 0.0
    %183 = vmatprep.subr.mxu0 0.0
    %184 = vmatpush1.msra.mxu0 0.0
    %185 = vmatprep.subr.mxu0 0.0
    %186 = vmatpush1.msra.mxu0 0.0
    %187 = vmatprep.subr.mxu0 0.0
    %188 = vmatpush1.msra.mxu0 0.0
    %189 = vmatprep.subr.mxu0 0.0
    %190 = vmatpush1.msra.mxu0 0.0
    %191 = vmatprep.subr.mxu0 0.0
    %192 = vmatpush1.msra.mxu0 0.0
    %193 = vmatprep.subr.mxu0 0.0
    %194 = vmatpush1.msra.mxu0 0.0
    %195 = vmatprep.subr.mxu0 0.0
    %196 = vmatpush1.msra.mxu0 0.0
    %197 = vmatprep.subr.mxu0 0.0
    %198 = vmatpush1.msra.mxu0 0.0
    %199 = vmatprep.subr.mxu0 0.0
    %200 = vmatpush1.msra.mxu0 0.0
    %201 = vmatprep.subr.mxu0 0.0
    %202 = vmatpush1.msra.mxu0 0.0
    %203 = vmatprep.subr.mxu0 0.0
    %204 = vmatpush1.msra.mxu0 0.0
    %205 = vmatprep.subr.mxu0 0.0
    %206 = vmatpush1.msra.mxu0 0.0
    %207 = vmatprep.mubr.f32.mxu0 0.0
    %208 = vmatmul.mubr.f32.gmra.mrb[0].mxu0 %v141
    %v209 = vpop.f32.mrb[0].mxu0
    %v210 = vadd.f32 0.0, %v209
    %v211 = vpop.f32.mrb[0].mxu0
    %212 = vdwg.mxu0
    %v213 = vadd.f32 %v131, %v210
    %v214 = vxor.u32 %v213, 2147483648
    %v215 = vmul.f32 %v214, 1.442695
    %v216 = vpow.pop %v215
    %v217 = vadd.f32 %v216, 1.0
    %v218 = vrcp.pop %v217
    %v219 = vmul.f32 1.0, %v218
    %v220 = vtanh.pop %v213
    %v221 = vmul.f32 %v219, 0.0
    %223 = vrot.lane.b32.xlu0 %v220, 64
    %v224 = vpop.permute.xlu0 %223
    %v226 = vmul.f32 %v219, %v224
    %228 = vrot.lane.b32.xlu0 %v226, 32
    %v229 = vpop.permute.xlu0 %228
    %v231 = vadd.f32 %v221, %v229
    %v232 = vtanh.pop %v231
    %234 = vrot.lane.b32.xlu0 %v232, 64
    %v235 = vpop.permute.xlu0 %234
    %v237 = vmul.f32 %v219, %v235
    %v239 = vlaneseq
    %v240 = vshrl.u32 %v239, 7
    %v241 = vsub.s32 0, %v240
    %v242 = vrot.slane %v45, %v241
    %245 = vrot.lane.b32.xlu0 %v237, 32
    %v246 = vpop.permute.xlu0 %245
    %v247 = vsel %vm139, %v246, 0
    %249 = vmatprep.subr.mxu0 0.0
    %250 = vmatpush1.msra.mxu0 %v39
    %251 = vmatprep.subr.mxu0 0.0
    %252 = vmatpush1.msra.mxu0 %v40
    %253 = vmatprep.subr.mxu0 0.0
    %254 = vmatpush1.msra.mxu0 %v41
    %255 = vmatprep.subr.mxu0 0.0
    %256 = vmatpush1.msra.mxu0 %v42
    %257 = vmatprep.subr.mxu0 0.0
    %258 = vmatpush1.msra.mxu0 0.0
    %259 = vmatprep.subr.mxu0 0.0
    %260 = vmatpush1.msra.mxu0 0.0
    %261 = vmatprep.subr.mxu0 0.0
    %262 = vmatpush1.msra.mxu0 0.0
    %263 = vmatprep.subr.mxu0 0.0
    %264 = vmatpush1.msra.mxu0 0.0
    %265 = vmatprep.subr.mxu0 0.0
    %266 = vmatpush1.msra.mxu0 0.0
    %267 = vmatprep.subr.mxu0 0.0
    %268 = vmatpush1.msra.mxu0 0.0
    %269 = vmatprep.subr.mxu0 0.0
    %270 = vmatpush1.msra.mxu0 0.0
    %271 = vmatprep.subr.mxu0 0.0
    %272 = vmatpush1.msra.mxu0 0.0
    %273 = vmatprep.subr.mxu0 0.0
    %274 = vmatpush1.msra.mxu0 0.0
    %275 = vmatprep.subr.mxu0 0.0
    %276 = vmatpush1.msra.mxu0 0.0
    %277 = vmatprep.subr.mxu0 0.0
    %278 = vmatpush1.msra.mxu0 0.0
    %279 = vmatprep.subr.mxu0 0.0
    %280 = vmatpush1.msra.mxu0 0.0
    %281 = vmatprep.subr.mxu0 0.0
    %282 = vmatpush1.msra.mxu0 0.0
    %283 = vmatprep.subr.mxu0 0.0
    %284 = vmatpush1.msra.mxu0 0.0
    %285 = vmatprep.subr.mxu0 0.0
    %286 = vmatpush1.msra.mxu0 0.0
    %287 = vmatprep.subr.mxu0 0.0
    %288 = vmatpush1.msra.mxu0 0.0
    %289 = vmatprep.subr.mxu0 0.0
    %290 = vmatpush1.msra.mxu0 0.0
    %291 = vmatprep.subr.mxu0 0.0
    %292 = vmatpush1.msra.mxu0 0.0
    %293 = vmatprep.subr.mxu0 0.0
    %294 = vmatpush1.msra.mxu0 0.0
    %295 = vmatprep.subr.mxu0 0.0
    %296 = vmatpush1.msra.mxu0 0.0
    %297 = vmatprep.subr.mxu0 0.0
    %298 = vmatpush1.msra.mxu0 0.0
    %299 = vmatprep.subr.mxu0 0.0
    %300 = vmatpush1.msra.mxu0 0.0
    %301 = vmatprep.subr.mxu0 0.0
    %302 = vmatpush1.msra.mxu0 0.0
    %303 = vmatprep.subr.mxu0 0.0
    %304 = vmatpush1.msra.mxu0 0.0
    %305 = vmatprep.subr.mxu0 0.0
    %306 = vmatpush1.msra.mxu0 0.0
    %307 = vmatprep.subr.mxu0 0.0
    %308 = vmatpush1.msra.mxu0 0.0
    %309 = vmatprep.subr.mxu0 0.0
    %310 = vmatpush1.msra.mxu0 0.0
    %311 = vmatprep.subr.mxu0 0.0
    %312 = vmatpush1.msra.mxu0 0.0
    %313 = vmatprep.mubr.f32.mxu0 0.0
    %314 = vmatmul.mubr.f32.gmra.mrb[0].mxu0 %v247
    %v315 = vpop.f32.mrb[0].mxu0
    %v316 = vadd.f32 %v242, %v315
    %v317 = vpop.f32.mrb[0].mxu0
    %318 = vdwg.mxu0
    %v319 = vsel %vm57, 0.0, 0
    %321 = vmatprep.subr.mxu0 0.0
    %322 = vmatpush1.msra.mxu0 %v43
    %323 = vmatprep.subr.mxu0 0.0
    %324 = vmatpush1.msra.mxu0 %v44
    %325 = vmatprep.subr.mxu0 0.0
    %326 = vmatpush1.msra.mxu0 0.0
    %327 = vmatprep.subr.mxu0 0.0
    %328 = vmatpush1.msra.mxu0 0.0
    %329 = vmatprep.subr.mxu0 0.0
    %330 = vmatpush1.msra.mxu0 0.0
    %331 = vmatprep.subr.mxu0 0.0
    %332 = vmatpush1.msra.mxu0 0.0
    %333 = vmatprep.subr.mxu0 0.0
    %334 = vmatpush1.msra.mxu0 0.0
    %335 = vmatprep.subr.mxu0 0.0
    %336 = vmatpush1.msra.mxu0 0.0
    %337 = vmatprep.subr.mxu0 0.0
    %338 = vmatpush1.msra.mxu0 0.0
    %339 = vmatprep.subr.mxu0 0.0
    %340 = vmatpush1.msra.mxu0 0.0
    %341 = vmatprep.subr.mxu0 0.0
    %342 = vmatpush1.msra.mxu0 0.0
    %343 = vmatprep.subr.mxu0 0.0
    %344 = vmatpush1.msra.mxu0 0.0
    %345 = vmatprep.subr.mxu0 0.0
    %346 = vmatpush1.msra.mxu0 0.0
    %347 = vmatprep.subr.mxu0 0.0
    %348 = vmatpush1.msra.mxu0 0.0
    %349 = vmatprep.subr.mxu0 0.0
    %350 = vmatpush1.msra.mxu0 0.0
    %351 = vmatprep.subr.mxu0 0.0
    %352 = vmatpush1.msra.mxu0 0.0
    %353 = vmatprep.subr.mxu0 0.0
    %354 = vmatpush1.msra.mxu0 0.0
    %355 = vmatprep.subr.mxu0 0.0
    %356 = vmatpush1.msra.mxu0 0.0
    %357 = vmatprep.subr.mxu0 0.0
    %358 = vmatpush1.msra.mxu0 0.0
    %359 = vmatprep.subr.mxu0 0.0
    %360 = vmatpush1.msra.mxu0 0.0
    %361 = vmatprep.subr.mxu0 0.0
    %362 = vmatpush1.msra.mxu0 0.0
    %363 = vmatprep.subr.mxu0 0.0
    %364 = vmatpush1.msra.mxu0 0.0
    %365 = vmatprep.subr.mxu0 0.0
    %366 = vmatpush1.msra.mxu0 0.0
    %367 = vmatprep.subr.mxu0 0.0
    %368 = vmatpush1.msra.mxu0 0.0
    %369 = vmatprep.subr.mxu0 0.0
    %370 = vmatpush1.msra.mxu0 0.0
    %371 = vmatprep.subr.mxu0 0.0
    %372 = vmatpush1.msra.mxu0 0.0
    %373 = vmatprep.subr.mxu0 0.0
    %374 = vmatpush1.msra.mxu0 0.0
    %375 = vmatprep.subr.mxu0 0.0
    %376 = vmatpush1.msra.mxu0 0.0
    %377 = vmatprep.subr.mxu0 0.0
    %378 = vmatpush1.msra.mxu0 0.0
    %379 = vmatprep.subr.mxu0 0.0
    %380 = vmatpush1.msra.mxu0 0.0
    %381 = vmatprep.subr.mxu0 0.0
    %382 = vmatpush1.msra.mxu0 0.0
    %383 = vmatprep.subr.mxu0 0.0
    %384 = vmatpush1.msra.mxu0 0.0
    %385 = vmatprep.mubr.f32.mxu0 0.0
    %386 = vmatmul.mubr.f32.gmra.mrb[0].mxu0 %v319
    %v387 = vpop.f32.mrb[0].mxu0
    %v388 = vadd.f32 0.0, %v387
    %v389 = vpop.f32.mrb[0].mxu0
    %390 = vdwg.mxu0
    %v391 = vadd.f32 %v316, %v388
    %v392 = vxor.u32 %v391, 2147483648
    %v393 = vmul.f32 %v392, 1.442695
    %v394 = vpow.pop %v393
    %v395 = vadd.f32 %v394, 1.0
    %v396 = vrcp.pop %v395
    %v397 = vmul.f32 1.0, %v396
    %v398 = vtanh.pop %v391
    %v399 = vmul.f32 %v397, 0.0
    %401 = vrot.lane.b32.xlu0 %v398, 96
    %v402 = vpop.permute.xlu0 %401
    %v404 = vmul.f32 %v397, %v402
    %406 = vrot.lane.b32.xlu0 %v404, 16
    %v407 = vpop.permute.xlu0 %406
    %v409 = vadd.f32 %v399, %v407
    %v410 = vtanh.pop %v409
    %412 = vrot.lane.b32.xlu0 %v410, 32
    %v413 = vpop.permute.xlu0 %412
    %v415 = vmul.f32 %v397, %v413
    %416 = vmatprep.subr.mxu0 0.0
    %417 = vmatpush1.msra.mxu0 %v35
    %418 = vmatprep.subr.mxu0 0.0
    %419 = vmatpush1.msra.mxu0 %v36
    %420 = vmatprep.subr.mxu0 0.0
    %421 = vmatpush1.msra.mxu0 %v37
    %422 = vmatprep.subr.mxu0 0.0
    %423 = vmatpush1.msra.mxu0 %v38
    %424 = vmatprep.subr.mxu0 0.0
    %425 = vmatpush1.msra.mxu0 0.0
    %426 = vmatprep.subr.mxu0 0.0
    %427 = vmatpush1.msra.mxu0 0.0
    %428 = vmatprep.subr.mxu0 0.0
    %429 = vmatpush1.msra.mxu0 0.0
    %430 = vmatprep.subr.mxu0 0.0
    %431 = vmatpush1.msra.mxu0 0.0
    %432 = vmatprep.subr.mxu0 0.0
    %433 = vmatpush1.msra.mxu0 0.0
    %434 = vmatprep.subr.mxu0 0.0
    %435 = vmatpush1.msra.mxu0 0.0
    %436 = vmatprep.subr.mxu0 0.0
    %437 = vmatpush1.msra.mxu0 0.0
    %438 = vmatprep.subr.mxu0 0.0
    %439 = vmatpush1.msra.mxu0 0.0
    %440 = vmatprep.subr.mxu0 0.0
    %441 = vmatpush1.msra.mxu0 0.0
    %442 = vmatprep.subr.mxu0 0.0
    %443 = vmatpush1.msra.mxu0 0.0
    %444 = vmatprep.subr.mxu0 0.0
    %445 = vmatpush1.msra.mxu0 0.0
    %446 = vmatprep.subr.mxu0 0.0
    %447 = vmatpush1.msra.mxu0 0.0
    %448 = vmatprep.subr.mxu0 0.0
    %449 = vmatpush1.msra.mxu0 0.0
    %450 = vmatprep.subr.mxu0 0.0
    %451 = vmatpush1.msra.mxu0 0.0
    %452 = vmatprep.subr.mxu0 0.0
    %453 = vmatpush1.msra.mxu0 0.0
    %454 = vmatprep.subr.mxu0 0.0
    %455 = vmatpush1.msra.mxu0 0.0
    %456 = vmatprep.subr.mxu0 0.0
    %457 = vmatpush1.msra.mxu0 0.0
    %458 = vmatprep.subr.mxu0 0.0
    %459 = vmatpush1.msra.mxu0 0.0
    %460 = vmatprep.subr.mxu0 0.0
    %461 = vmatpush1.msra.mxu0 0.0
    %462 = vmatprep.subr.mxu0 0.0
    %463 = vmatpush1.msra.mxu0 0.0
    %464 = vmatprep.subr.mxu0 0.0
    %465 = vmatpush1.msra.mxu0 0.0
    %466 = vmatprep.subr.mxu0 0.0
    %467 = vmatpush1.msra.mxu0 0.0
    %468 = vmatprep.subr.mxu0 0.0
    %469 = vmatpush1.msra.mxu0 0.0
    %470 = vmatprep.subr.mxu0 0.0
    %471 = vmatpush1.msra.mxu0 0.0
    %472 = vmatprep.subr.mxu0 0.0
    %473 = vmatpush1.msra.mxu0 0.0
    %474 = vmatprep.subr.mxu0 0.0
    %475 = vmatpush1.msra.mxu0 0.0
    %476 = vmatprep.subr.mxu0 0.0
    %477 = vmatpush1.msra.mxu0 0.0
    %478 = vmatprep.subr.mxu0 0.0
    %479 = vmatpush1.msra.mxu0 0.0
    %480 = vmatprep.mubr.f32.mxu0 0.0
    %481 = vmatmul.mubr.f32.gmra.mrb[0].mxu0 %v247
    %v482 = vpop.f32.mrb[0].mxu0
    %v483 = vadd.f32 0.0, %v482
    %v484 = vpop.f32.mrb[0].mxu0
    %485 = vdwg.mxu0
    %v487 = vrot.slane %v483, 6
    %v489 = vadd.f32 %v131, %v487
    %v490 = vxor.u32 %v489, 2147483648
    %v491 = vmul.f32 %v490, 1.442695
    %v492 = vpow.pop %v491
    %v493 = vadd.f32 %v492, 1.0
    %v494 = vrcp.pop %v493
    %v495 = vmul.f32 1.0, %v494
    %v496 = vtanh.pop %v489
    %v498 = vrot.slane %v231, 6
    %v500 = vmul.f32 %v495, %v498
    %502 = vrot.lane.b32.xlu0 %v496, 64
    %v503 = vpop.permute.xlu0 %502
    %v505 = vmul.f32 %v495, %v503
    %507 = vrot.lane.b32.xlu0 %v505, 32
    %v508 = vpop.permute.xlu0 %507
    %v510 = vadd.f32 %v500, %v508
    %v511 = vtanh.pop %v510
    %513 = vrot.lane.b32.xlu0 %v511, 64
    %v514 = vpop.permute.xlu0 %513
    %v516 = vmul.f32 %v495, %v514
    %v518 = vrot.slane %v516, 2
    %519 = vrot.lane.b32.xlu0 %v518, 32
    %v520 = vpop.permute.xlu0 %519
    %v521 = vsel %vm139, %v520, 0
    %523 = vmatprep.subr.mxu0 0.0
    %524 = vmatpush1.msra.mxu0 %v39
    %525 = vmatprep.subr.mxu0 0.0
    %526 = vmatpush1.msra.mxu0 %v40
    %527 = vmatprep.subr.mxu0 0.0
    %528 = vmatpush1.msra.mxu0 %v41
    %529 = vmatprep.subr.mxu0 0.0
    %530 = vmatpush1.msra.mxu0 %v42
    %531 = vmatprep.subr.mxu0 0.0
    %532 = vmatpush1.msra.mxu0 0.0
    %533 = vmatprep.subr.mxu0 0.0
    %534 = vmatpush1.msra.mxu0 0.0
    %535 = vmatprep.subr.mxu0 0.0
    %536 = vmatpush1.msra.mxu0 0.0
    %537 = vmatprep.subr.mxu0 0.0
    %538 = vmatpush1.msra.mxu0 0.0
    %539 = vmatprep.subr.mxu0 0.0
    %540 = vmatpush1.msra.mxu0 0.0
    %541 = vmatprep.subr.mxu0 0.0
    %542 = vmatpush1.msra.mxu0 0.0
    %543 = vmatprep.subr.mxu0 0.0
    %544 = vmatpush1.msra.mxu0 0.0
    %545 = vmatprep.subr.mxu0 0.0
    %546 = vmatpush1.msra.mxu0 0.0
    %547 = vmatprep.subr.mxu0 0.0
    %548 = vmatpush1.msra.mxu0 0.0
    %549 = vmatprep.subr.mxu0 0.0
    %550 = vmatpush1.msra.mxu0 0.0
    %551 = vmatprep.subr.mxu0 0.0
    %552 = vmatpush1.msra.mxu0 0.0
    %553 = vmatprep.subr.mxu0 0.0
    %554 = vmatpush1.msra.mxu0 0.0
    %555 = vmatprep.subr.mxu0 0.0
    %556 = vmatpush1.msra.mxu0 0.0
    %557 = vmatprep.subr.mxu0 0.0
    %558 = vmatpush1.msra.mxu0 0.0
    %559 = vmatprep.subr.mxu0 0.0
    %560 = vmatpush1.msra.mxu0 0.0
    %561 = vmatprep.subr.mxu0 0.0
    %562 = vmatpush1.msra.mxu0 0.0
    %563 = vmatprep.subr.mxu0 0.0
    %564 = vmatpush1.msra.mxu0 0.0
    %565 = vmatprep.subr.mxu0 0.0
    %566 = vmatpush1.msra.mxu0 0.0
    %567 = vmatprep.subr.mxu0 0.0
    %568 = vmatpush1.msra.mxu0 0.0
    %569 = vmatprep.subr.mxu0 0.0
    %570 = vmatpush1.msra.mxu0 0.0
    %571 = vmatprep.subr.mxu0 0.0
    %572 = vmatpush1.msra.mxu0 0.0
    %573 = vmatprep.subr.mxu0 0.0
    %574 = vmatpush1.msra.mxu0 0.0
    %575 = vmatprep.subr.mxu0 0.0
    %576 = vmatpush1.msra.mxu0 0.0
    %577 = vmatprep.subr.mxu0 0.0
    %578 = vmatpush1.msra.mxu0 0.0
    %579 = vmatprep.subr.mxu0 0.0
    %580 = vmatpush1.msra.mxu0 0.0
    %581 = vmatprep.subr.mxu0 0.0
    %582 = vmatpush1.msra.mxu0 0.0
    %583 = vmatprep.subr.mxu0 0.0
    %584 = vmatpush1.msra.mxu0 0.0
    %585 = vmatprep.subr.mxu0 0.0
    %586 = vmatpush1.msra.mxu0 0.0
    %587 = vmatprep.mubr.f32.mxu0 0.0
    %588 = vmatmul.mubr.f32.gmra.mrb[0].mxu0 %v521
    %v589 = vpop.f32.mrb[0].mxu0
    %v590 = vadd.f32 %v242, %v589
    %v591 = vpop.f32.mrb[0].mxu0
    %592 = vdwg.mxu0
    %594 = vrot.lane.b32.xlu0 %v415, 80
    %v595 = vpop.permute.xlu0 %594
    %v596 = vsel %vm57, %v595, 0
    %598 = vmatprep.subr.mxu0 0.0
    %599 = vmatpush1.msra.mxu0 %v43
    %600 = vmatprep.subr.mxu0 0.0
    %601 = vmatpush1.msra.mxu0 %v44
    %602 = vmatprep.subr.mxu0 0.0
    %603 = vmatpush1.msra.mxu0 0.0
    %604 = vmatprep.subr.mxu0 0.0
    %605 = vmatpush1.msra.mxu0 0.0
    %606 = vmatprep.subr.mxu0 0.0
    %607 = vmatpush1.msra.mxu0 0.0
    %608 = vmatprep.subr.mxu0 0.0
    %609 = vmatpush1.msra.mxu0 0.0
    %610 = vmatprep.subr.mxu0 0.0
    %611 = vmatpush1.msra.mxu0 0.0
    %612 = vmatprep.subr.mxu0 0.0
    %613 = vmatpush1.msra.mxu0 0.0
    %614 = vmatprep.subr.mxu0 0.0
    %615 = vmatpush1.msra.mxu0 0.0
    %616 = vmatprep.subr.mxu0 0.0
    %617 = vmatpush1.msra.mxu0 0.0
    %618 = vmatprep.subr.mxu0 0.0
    %619 = vmatpush1.msra.mxu0 0.0
    %620 = vmatprep.subr.mxu0 0.0
    %621 = vmatpush1.msra.mxu0 0.0
    %622 = vmatprep.subr.mxu0 0.0
    %623 = vmatpush1.msra.mxu0 0.0
    %624 = vmatprep.subr.mxu0 0.0
    %625 = vmatpush1.msra.mxu0 0.0
    %626 = vmatprep.subr.mxu0 0.0
    %627 = vmatpush1.msra.mxu0 0.0
    %628 = vmatprep.subr.mxu0 0.0
    %629 = vmatpush1.msra.mxu0 0.0
    %630 = vmatprep.subr.mxu0 0.0
    %631 = vmatpush1.msra.mxu0 0.0
    %632 = vmatprep.subr.mxu0 0.0
    %633 = vmatpush1.msra.mxu0 0.0
    %634 = vmatprep.subr.mxu0 0.0
    %635 = vmatpush1.msra.mxu0 0.0
    %636 = vmatprep.subr.mxu0 0.0
    %637 = vmatpush1.msra.mxu0 0.0
    %638 = vmatprep.subr.mxu0 0.0
    %639 = vmatpush1.msra.mxu0 0.0
    %640 = vmatprep.subr.mxu0 0.0
    %641 = vmatpush1.msra.mxu0 0.0
    %642 = vmatprep.subr.mxu0 0.0
    %643 = vmatpush1.msra.mxu0 0.0
    %644 = vmatprep.subr.mxu0 0.0
    %645 = vmatpush1.msra.mxu0 0.0
    %646 = vmatprep.subr.mxu0 0.0
    %647 = vmatpush1.msra.mxu0 0.0
    %648 = vmatprep.subr.mxu0 0.0
    %649 = vmatpush1.msra.mxu0 0.0
    %650 = vmatprep.subr.mxu0 0.0
    %651 = vmatpush1.msra.mxu0 0.0
    %652 = vmatprep.subr.mxu0 0.0
    %653 = vmatpush1.msra.mxu0 0.0
    %654 = vmatprep.subr.mxu0 0.0
    %655 = vmatpush1.msra.mxu0 0.0
    %656 = vmatprep.subr.mxu0 0.0
    %657 = vmatpush1.msra.mxu0 0.0
    %658 = vmatprep.subr.mxu0 0.0
    %659 = vmatpush1.msra.mxu0 0.0
    %660 = vmatprep.subr.mxu0 0.0
    %661 = vmatpush1.msra.mxu0 0.0
    %662 = vmatprep.mubr.f32.mxu0 0.0
    %663 = vmatmul.mubr.f32.gmra.mrb[0].mxu0 %v596
    %v664 = vpop.f32.mrb[0].mxu0
    %v665 = vadd.f32 0.0, %v664
    %v666 = vpop.f32.mrb[0].mxu0
    %667 = vdwg.mxu0
    %v668 = vadd.f32 %v590, %v665
    %v669 = vxor.u32 %v668, 2147483648
    %v670 = vmul.f32 %v669, 1.442695
    %v671 = vpow.pop %v670
    %v672 = vadd.f32 %v671, 1.0
    %v673 = vrcp.pop %v672
    %v674 = vmul.f32 1.0, %v673
    %v675 = vtanh.pop %v668
    %v676 = vmul.f32 %v674, %v409
    %678 = vrot.lane.b32.xlu0 %v675, 96
    %v679 = vpop.permute.xlu0 %678
    %v681 = vmul.f32 %v674, %v679
    %683 = vrot.lane.b32.xlu0 %v681, 16
    %v684 = vpop.permute.xlu0 %683
    %v686 = vadd.f32 %v676, %v684
    %v687 = vtanh.pop %v686
    %689 = vrot.lane.b32.xlu0 %v687, 32
    %v690 = vpop.permute.xlu0 %689
    %v692 = vmul.f32 %v674, %v690
    %693 = vmatprep.subr.mxu0 0.0
    %694 = vmatpush1.msra.mxu0 %v35
    %695 = vmatprep.subr.mxu0 0.0
    %696 = vmatpush1.msra.mxu0 %v36
    %697 = vmatprep.subr.mxu0 0.0
    %698 = vmatpush1.msra.mxu0 %v37
    %699 = vmatprep.subr.mxu0 0.0
    %700 = vmatpush1.msra.mxu0 %v38
    %701 = vmatprep.subr.mxu0 0.0
    %702 = vmatpush1.msra.mxu0 0.0
    %703 = vmatprep.subr.mxu0 0.0
    %704 = vmatpush1.msra.mxu0 0.0
    %705 = vmatprep.subr.mxu0 0.0
    %706 = vmatpush1.msra.mxu0 0.0
    %707 = vmatprep.subr.mxu0 0.0
    %708 = vmatpush1.msra.mxu0 0.0
    %709 = vmatprep.subr.mxu0 0.0
    %710 = vmatpush1.msra.mxu0 0.0
    %711 = vmatprep.subr.mxu0 0.0
    %712 = vmatpush1.msra.mxu0 0.0
    %713 = vmatprep.subr.mxu0 0.0
    %714 = vmatpush1.msra.mxu0 0.0
    %715 = vmatprep.subr.mxu0 0.0
    %716 = vmatpush1.msra.mxu0 0.0
    %717 = vmatprep.subr.mxu0 0.0
    %718 = vmatpush1.msra.mxu0 0.0
    %719 = vmatprep.subr.mxu0 0.0
    %720 = vmatpush1.msra.mxu0 0.0
    %721 = vmatprep.subr.mxu0 0.0
    %722 = vmatpush1.msra.mxu0 0.0
    %723 = vmatprep.subr.mxu0 0.0
    %724 = vmatpush1.msra.mxu0 0.0
    %725 = vmatprep.subr.mxu0 0.0
    %726 = vmatpush1.msra.mxu0 0.0
    %727 = vmatprep.subr.mxu0 0.0
    %728 = vmatpush1.msra.mxu0 0.0
    %729 = vmatprep.subr.mxu0 0.0
    %730 = vmatpush1.msra.mxu0 0.0
    %731 = vmatprep.subr.mxu0 0.0
    %732 = vmatpush1.msra.mxu0 0.0
    %733 = vmatprep.subr.mxu0 0.0
    %734 = vmatpush1.msra.mxu0 0.0
    %735 = vmatprep.subr.mxu0 0.0
    %736 = vmatpush1.msra.mxu0 0.0
    %737 = vmatprep.subr.mxu0 0.0
    %738 = vmatpush1.msra.mxu0 0.0
    %739 = vmatprep.subr.mxu0 0.0
    %740 = vmatpush1.msra.mxu0 0.0
    %741 = vmatprep.subr.mxu0 0.0
    %742 = vmatpush1.msra.mxu0 0.0
    %743 = vmatprep.subr.mxu0 0.0
    %744 = vmatpush1.msra.mxu0 0.0
    %745 = vmatprep.subr.mxu0 0.0
    %746 = vmatpush1.msra.mxu0 0.0
    %747 = vmatprep.subr.mxu0 0.0
    %748 = vmatpush1.msra.mxu0 0.0
    %749 = vmatprep.subr.mxu0 0.0
    %750 = vmatpush1.msra.mxu0 0.0
    %751 = vmatprep.subr.mxu0 0.0
    %752 = vmatpush1.msra.mxu0 0.0
    %753 = vmatprep.subr.mxu0 0.0
    %754 = vmatpush1.msra.mxu0 0.0
    %755 = vmatprep.subr.mxu0 0.0
    %756 = vmatpush1.msra.mxu0 0.0
    %757 = vmatprep.mubr.f32.mxu0 0.0
    %758 = vmatmul.mubr.f32.gmra.mrb[0].mxu0 %v521
    %v759 = vpop.f32.mrb[0].mxu0
    %v760 = vadd.f32 0.0, %v759
    %v761 = vpop.f32.mrb[0].mxu0
    %762 = vdwg.mxu0
    %v764 = vrot.slane %v760, 4
    %v766 = vadd.f32 %v131, %v764
    %v767 = vxor.u32 %v766, 2147483648
    %v768 = vmul.f32 %v767, 1.442695
    %v769 = vpow.pop %v768
    %v770 = vadd.f32 %v769, 1.0
    %v771 = vrcp.pop %v770
    %v772 = vmul.f32 1.0, %v771
    %v773 = vtanh.pop %v766
    %v775 = vrot.slane %v510, 6
    %v777 = vmul.f32 %v772, %v775
    %779 = vrot.lane.b32.xlu0 %v773, 64
    %v780 = vpop.permute.xlu0 %779
    %v782 = vmul.f32 %v772, %v780
    %784 = vrot.lane.b32.xlu0 %v782, 32
    %v785 = vpop.permute.xlu0 %784
    %v787 = vadd.f32 %v777, %v785
    %v788 = vtanh.pop %v787
    %790 = vrot.lane.b32.xlu0 %v788, 64
    %v791 = vpop.permute.xlu0 %790
    %v793 = vmul.f32 %v772, %v791
    %v795 = vrot.slane %v793, 4
    %796 = vrot.lane.b32.xlu0 %v795, 32
    %v797 = vpop.permute.xlu0 %796
    %v798 = vsel %vm139, %v797, 0
    %800 = vmatprep.subr.mxu0 0.0
    %801 = vmatpush1.msra.mxu0 %v39
    %802 = vmatprep.subr.mxu0 0.0
    %803 = vmatpush1.msra.mxu0 %v40
    %804 = vmatprep.subr.mxu0 0.0
    %805 = vmatpush1.msra.mxu0 %v41
    %806 = vmatprep.subr.mxu0 0.0
    %807 = vmatpush1.msra.mxu0 %v42
    %808 = vmatprep.subr.mxu0 0.0
    %809 = vmatpush1.msra.mxu0 0.0
    %810 = vmatprep.subr.mxu0 0.0
    %811 = vmatpush1.msra.mxu0 0.0
    %812 = vmatprep.subr.mxu0 0.0
    %813 = vmatpush1.msra.mxu0 0.0
    %814 = vmatprep.subr.mxu0 0.0
    %815 = vmatpush1.msra.mxu0 0.0
    %816 = vmatprep.subr.mxu0 0.0
    %817 = vmatpush1.msra.mxu0 0.0
    %818 = vmatprep.subr.mxu0 0.0
    %819 = vmatpush1.msra.mxu0 0.0
    %820 = vmatprep.subr.mxu0 0.0
    %821 = vmatpush1.msra.mxu0 0.0
    %822 = vmatprep.subr.mxu0 0.0
    %823 = vmatpush1.msra.mxu0 0.0
    %824 = vmatprep.subr.mxu0 0.0
    %825 = vmatpush1.msra.mxu0 0.0
    %826 = vmatprep.subr.mxu0 0.0
    %827 = vmatpush1.msra.mxu0 0.0
    %828 = vmatprep.subr.mxu0 0.0
    %829 = vmatpush1.msra.mxu0 0.0
    %830 = vmatprep.subr.mxu0 0.0
    %831 = vmatpush1.msra.mxu0 0.0
    %832 = vmatprep.subr.mxu0 0.0
    %833 = vmatpush1.msra.mxu0 0.0
    %834 = vmatprep.subr.mxu0 0.0
    %835 = vmatpush1.msra.mxu0 0.0
    %836 = vmatprep.subr.mxu0 0.0
    %837 = vmatpush1.msra.mxu0 0.0
    %838 = vmatprep.subr.mxu0 0.0
    %839 = vmatpush1.msra.mxu0 0.0
    %840 = vmatprep.subr.mxu0 0.0
    %841 = vmatpush1.msra.mxu0 0.0
    %842 = vmatprep.subr.mxu0 0.0
    %843 = vmatpush1.msra.mxu0 0.0
    %844 = vmatprep.subr.mxu0 0.0
    %845 = vmatpush1.msra.mxu0 0.0
    %846 = vmatprep.subr.mxu0 0.0
    %847 = vmatpush1.msra.mxu0 0.0
    %848 = vmatprep.subr.mxu0 0.0
    %849 = vmatpush1.msra.mxu0 0.0
    %850 = vmatprep.subr.mxu0 0.0
    %851 = vmatpush1.msra.mxu0 0.0
    %852 = vmatprep.subr.mxu0 0.0
    %853 = vmatpush1.msra.mxu0 0.0
    %854 = vmatprep.subr.mxu0 0.0
    %855 = vmatpush1.msra.mxu0 0.0
    %856 = vmatprep.subr.mxu0 0.0
    %857 = vmatpush1.msra.mxu0 0.0
    %858 = vmatprep.subr.mxu0 0.0
    %859 = vmatpush1.msra.mxu0 0.0
    %860 = vmatprep.subr.mxu0 0.0
    %861 = vmatpush1.msra.mxu0 0.0
    %862 = vmatprep.subr.mxu0 0.0
    %863 = vmatpush1.msra.mxu0 0.0
    %864 = vmatprep.mubr.f32.mxu0 0.0
    %865 = vmatmul.mubr.f32.gmra.mrb[0].mxu0 %v798
    %v866 = vpop.f32.mrb[0].mxu0
    %v867 = vadd.f32 %v242, %v866
    %v868 = vpop.f32.mrb[0].mxu0
    %869 = vdwg.mxu0
    %871 = vrot.lane.b32.xlu0 %v692, 80
    %v872 = vpop.permute.xlu0 %871
    %v873 = vsel %vm57, %v872, 0
    %875 = vmatprep.subr.mxu0 0.0
    %876 = vmatpush1.msra.mxu0 %v43
    %877 = vmatprep.subr.mxu0 0.0
    %878 = vmatpush1.msra.mxu0 %v44
    %879 = vmatprep.subr.mxu0 0.0
    %880 = vmatpush1.msra.mxu0 0.0
    %881 = vmatprep.subr.mxu0 0.0
    %882 = vmatpush1.msra.mxu0 0.0
    %883 = vmatprep.subr.mxu0 0.0
    %884 = vmatpush1.msra.mxu0 0.0
    %885 = vmatprep.subr.mxu0 0.0
    %886 = vmatpush1.msra.mxu0 0.0
    %887 = vmatprep.subr.mxu0 0.0
    %888 = vmatpush1.msra.mxu0 0.0
    %889 = vmatprep.subr.mxu0 0.0
    %890 = vmatpush1.msra.mxu0 0.0
    %891 = vmatprep.subr.mxu0 0.0
    %892 = vmatpush1.msra.mxu0 0.0
    %893 = vmatprep.subr.mxu0 0.0
    %894 = vmatpush1.msra.mxu0 0.0
    %895 = vmatprep.subr.mxu0 0.0
    %896 = vmatpush1.msra.mxu0 0.0
    %897 = vmatprep.subr.mxu0 0.0
    %898 = vmatpush1.msra.mxu0 0.0
    %899 = vmatprep.subr.mxu0 0.0
    %900 = vmatpush1.msra.mxu0 0.0
    %901 = vmatprep.subr.mxu0 0.0
    %902 = vmatpush1.msra.mxu0 0.0
    %903 = vmatprep.subr.mxu0 0.0
    %904 = vmatpush1.msra.mxu0 0.0
    %905 = vmatprep.subr.mxu0 0.0
    %906 = vmatpush1.msra.mxu0 0.0
    %907 = vmatprep.subr.mxu0 0.0
    %908 = vmatpush1.msra.mxu0 0.0
    %909 = vmatprep.subr.mxu0 0.0
    %910 = vmatpush1.msra.mxu0 0.0
    %911 = vmatprep.subr.mxu0 0.0
    %912 = vmatpush1.msra.mxu0 0.0
    %913 = vmatprep.subr.mxu0 0.0
    %914 = vmatpush1.msra.mxu0 0.0
    %915 = vmatprep.subr.mxu0 0.0
    %916 = vmatpush1.msra.mxu0 0.0
    %917 = vmatprep.subr.mxu0 0.0
    %918 = vmatpush1.msra.mxu0 0.0
    %919 = vmatprep.subr.mxu0 0.0
    %920 = vmatpush1.msra.mxu0 0.0
    %921 = vmatprep.subr.mxu0 0.0
    %922 = vmatpush1.msra.mxu0 0.0
    %923 = vmatprep.subr.mxu0 0.0
    %924 = vmatpush1.msra.mxu0 0.0
    %925 = vmatprep.subr.mxu0 0.0
    %926 = vmatpush1.msra.mxu0 0.0
    %927 = vmatprep.subr.mxu0 0.0
    %928 = vmatpush1.msra.mxu0 0.0
    %929 = vmatprep.subr.mxu0 0.0
    %930 = vmatpush1.msra.mxu0 0.0
    %931 = vmatprep.subr.mxu0 0.0
    %932 = vmatpush1.msra.mxu0 0.0
    %933 = vmatprep.subr.mxu0 0.0
    %934 = vmatpush1.msra.mxu0 0.0
    %935 = vmatprep.subr.mxu0 0.0
    %936 = vmatpush1.msra.mxu0 0.0
    %937 = vmatprep.subr.mxu0 0.0
    %938 = vmatpush1.msra.mxu0 0.0
    %939 = vmatprep.mubr.f32.mxu0 0.0
    %940 = vmatmul.mubr.f32.gmra.mrb[0].mxu0 %v873
    %v941 = vpop.f32.mrb[0].mxu0
    %v942 = vadd.f32 0.0, %v941
    %v943 = vpop.f32.mrb[0].mxu0
    %944 = vdwg.mxu0
    %v945 = vadd.f32 %v867, %v942
    %v946 = vxor.u32 %v945, 2147483648
    %v947 = vmul.f32 %v946, 1.442695
    %v948 = vpow.pop %v947
    %v949 = vadd.f32 %v948, 1.0
    %v950 = vrcp.pop %v949
    %v951 = vmul.f32 1.0, %v950
    %v952 = vtanh.pop %v945
    %v953 = vmul.f32 %v951, %v686
    %955 = vrot.lane.b32.xlu0 %v952, 96
    %v956 = vpop.permute.xlu0 %955
    %v958 = vmul.f32 %v951, %v956
    %960 = vrot.lane.b32.xlu0 %v958, 16
    %v961 = vpop.permute.xlu0 %960
    %v963 = vadd.f32 %v953, %v961
    %v964 = vtanh.pop %v963
    %966 = vrot.lane.b32.xlu0 %v964, 32
    %v967 = vpop.permute.xlu0 %966
    %v969 = vmul.f32 %v951, %v967
    %970 = vmatprep.subr.mxu0 0.0
    %971 = vmatpush1.msra.mxu0 %v35
    %972 = vmatprep.subr.mxu0 0.0
    %973 = vmatpush1.msra.mxu0 %v36
    %974 = vmatprep.subr.mxu0 0.0
    %975 = vmatpush1.msra.mxu0 %v37
    %976 = vmatprep.subr.mxu0 0.0
    %977 = vmatpush1.msra.mxu0 %v38
    %978 = vmatprep.subr.mxu0 0.0
    %979 = vmatpush1.msra.mxu0 0.0
    %980 = vmatprep.subr.mxu0 0.0
    %981 = vmatpush1.msra.mxu0 0.0
    %982 = vmatprep.subr.mxu0 0.0
    %983 = vmatpush1.msra.mxu0 0.0
    %984 = vmatprep.subr.mxu0 0.0
    %985 = vmatpush1.msra.mxu0 0.0
    %986 = vmatprep.subr.mxu0 0.0
    %987 = vmatpush1.msra.mxu0 0.0
    %988 = vmatprep.subr.mxu0 0.0
    %989 = vmatpush1.msra.mxu0 0.0
    %990 = vmatprep.subr.mxu0 0.0
    %991 = vmatpush1.msra.mxu0 0.0
    %992 = vmatprep.subr.mxu0 0.0
    %993 = vmatpush1.msra.mxu0 0.0
    %994 = vmatprep.subr.mxu0 0.0
    %995 = vmatpush1.msra.mxu0 0.0
    %996 = vmatprep.subr.mxu0 0.0
    %997 = vmatpush1.msra.mxu0 0.0
    %998 = vmatprep.subr.mxu0 0.0
    %999 = vmatpush1.msra.mxu0 0.0
    %1000 = vmatprep.subr.mxu0 0.0
    %1001 = vmatpush1.msra.mxu0 0.0
    %1002 = vmatprep.subr.mxu0 0.0
    %1003 = vmatpush1.msra.mxu0 0.0
    %1004 = vmatprep.subr.mxu0 0.0
    %1005 = vmatpush1.msra.mxu0 0.0
    %1006 = vmatprep.subr.mxu0 0.0
    %1007 = vmatpush1.msra.mxu0 0.0
    %1008 = vmatprep.subr.mxu0 0.0
    %1009 = vmatpush1.msra.mxu0 0.0
    %1010 = vmatprep.subr.mxu0 0.0
    %1011 = vmatpush1.msra.mxu0 0.0
    %1012 = vmatprep.subr.mxu0 0.0
    %1013 = vmatpush1.msra.mxu0 0.0
    %1014 = vmatprep.subr.mxu0 0.0
    %1015 = vmatpush1.msra.mxu0 0.0
    %1016 = vmatprep.subr.mxu0 0.0
    %1017 = vmatpush1.msra.mxu0 0.0
    %1018 = vmatprep.subr.mxu0 0.0
    %1019 = vmatpush1.msra.mxu0 0.0
    %1020 = vmatprep.subr.mxu0 0.0
    %1021 = vmatpush1.msra.mxu0 0.0
    %1022 = vmatprep.subr.mxu0 0.0
    %1023 = vmatpush1.msra.mxu0 0.0
    %1024 = vmatprep.subr.mxu0 0.0
    %1025 = vmatpush1.msra.mxu0 0.0
    %1026 = vmatprep.subr.mxu0 0.0
    %1027 = vmatpush1.msra.mxu0 0.0
    %1028 = vmatprep.subr.mxu0 0.0
    %1029 = vmatpush1.msra.mxu0 0.0
    %1030 = vmatprep.subr.mxu0 0.0
    %1031 = vmatpush1.msra.mxu0 0.0
    %1032 = vmatprep.subr.mxu0 0.0
    %1033 = vmatpush1.msra.mxu0 0.0
    %1034 = vmatprep.mubr.f32.mxu0 0.0
    %1035 = vmatmul.mubr.f32.gmra.mrb[0].mxu0 %v798
    %v1036 = vpop.f32.mrb[0].mxu0
    %v1037 = vadd.f32 0.0, %v1036
    %v1038 = vpop.f32.mrb[0].mxu0
    %1039 = vdwg.mxu0
    %v1041 = vrot.slane %v1037, 2
    %v1043 = vadd.f32 %v131, %v1041
    %v1044 = vxor.u32 %v1043, 2147483648
    %v1045 = vmul.f32 %v1044, 1.442695
    %v1046 = vpow.pop %v1045
    %v1047 = vadd.f32 %v1046, 1.0
    %v1048 = vrcp.pop %v1047
    %v1049 = vmul.f32 1.0, %v1048
    %v1050 = vtanh.pop %v1043
    %v1052 = vrot.slane %v787, 6
    %v1054 = vmul.f32 %v1049, %v1052
    %1056 = vrot.lane.b32.xlu0 %v1050, 64
    %v1057 = vpop.permute.xlu0 %1056
    %v1059 = vmul.f32 %v1049, %v1057
    %1061 = vrot.lane.b32.xlu0 %v1059, 32
    %v1062 = vpop.permute.xlu0 %1061
    %v1064 = vadd.f32 %v1054, %v1062
    %v1065 = vtanh.pop %v1064
    %1067 = vrot.lane.b32.xlu0 %v1065, 64
    %v1068 = vpop.permute.xlu0 %1067
    %v1070 = vmul.f32 %v1049, %v1068
    %v1072 = vrot.slane %v1070, 6
    %1073 = vrot.lane.b32.xlu0 %v1072, 32
    %v1074 = vpop.permute.xlu0 %1073
    %v1075 = vsel %vm139, %v1074, 0
    %1077 = vmatprep.subr.mxu0 0.0
    %1078 = vmatpush1.msra.mxu0 %v39
    %1079 = vmatprep.subr.mxu0 0.0
    %1080 = vmatpush1.msra.mxu0 %v40
    %1081 = vmatprep.subr.mxu0 0.0
    %1082 = vmatpush1.msra.mxu0 %v41
    %1083 = vmatprep.subr.mxu0 0.0
    %1084 = vmatpush1.msra.mxu0 %v42
    %1085 = vmatprep.subr.mxu0 0.0
    %1086 = vmatpush1.msra.mxu0 0.0
    %1087 = vmatprep.subr.mxu0 0.0
    %1088 = vmatpush1.msra.mxu0 0.0
    %1089 = vmatprep.subr.mxu0 0.0
    %1090 = vmatpush1.msra.mxu0 0.0
    %1091 = vmatprep.subr.mxu0 0.0
    %1092 = vmatpush1.msra.mxu0 0.0
    %1093 = vmatprep.subr.mxu0 0.0
    %1094 = vmatpush1.msra.mxu0 0.0
    %1095 = vmatprep.subr.mxu0 0.0
    %1096 = vmatpush1.msra.mxu0 0.0
    %1097 = vmatprep.subr.mxu0 0.0
    %1098 = vmatpush1.msra.mxu0 0.0
    %1099 = vmatprep.subr.mxu0 0.0
    %1100 = vmatpush1.msra.mxu0 0.0
    %1101 = vmatprep.subr.mxu0 0.0
    %1102 = vmatpush1.msra.mxu0 0.0
    %1103 = vmatprep.subr.mxu0 0.0
    %1104 = vmatpush1.msra.mxu0 0.0
    %1105 = vmatprep.subr.mxu0 0.0
    %1106 = vmatpush1.msra.mxu0 0.0
    %1107 = vmatprep.subr.mxu0 0.0
    %1108 = vmatpush1.msra.mxu0 0.0
    %1109 = vmatprep.subr.mxu0 0.0
    %1110 = vmatpush1.msra.mxu0 0.0
    %1111 = vmatprep.subr.mxu0 0.0
    %1112 = vmatpush1.msra.mxu0 0.0
    %1113 = vmatprep.subr.mxu0 0.0
    %1114 = vmatpush1.msra.mxu0 0.0
    %1115 = vmatprep.subr.mxu0 0.0
    %1116 = vmatpush1.msra.mxu0 0.0
    %1117 = vmatprep.subr.mxu0 0.0
    %1118 = vmatpush1.msra.mxu0 0.0
    %1119 = vmatprep.subr.mxu0 0.0
    %1120 = vmatpush1.msra.mxu0 0.0
    %1121 = vmatprep.subr.mxu0 0.0
    %1122 = vmatpush1.msra.mxu0 0.0
    %1123 = vmatprep.subr.mxu0 0.0
    %1124 = vmatpush1.msra.mxu0 0.0
    %1125 = vmatprep.subr.mxu0 0.0
    %1126 = vmatpush1.msra.mxu0 0.0
    %1127 = vmatprep.subr.mxu0 0.0
    %1128 = vmatpush1.msra.mxu0 0.0
    %1129 = vmatprep.subr.mxu0 0.0
    %1130 = vmatpush1.msra.mxu0 0.0
    %1131 = vmatprep.subr.mxu0 0.0
    %1132 = vmatpush1.msra.mxu0 0.0
    %1133 = vmatprep.subr.mxu0 0.0
    %1134 = vmatpush1.msra.mxu0 0.0
    %1135 = vmatprep.subr.mxu0 0.0
    %1136 = vmatpush1.msra.mxu0 0.0
    %1137 = vmatprep.subr.mxu0 0.0
    %1138 = vmatpush1.msra.mxu0 0.0
    %1139 = vmatprep.subr.mxu0 0.0
    %1140 = vmatpush1.msra.mxu0 0.0
    %1141 = vmatprep.mubr.f32.mxu0 0.0
    %1142 = vmatmul.mubr.f32.gmra.mrb[0].mxu0 %v1075
    %v1143 = vpop.f32.mrb[0].mxu0
    %v1144 = vadd.f32 %v242, %v1143
    %v1145 = vpop.f32.mrb[0].mxu0
    %1146 = vdwg.mxu0
    %1148 = vrot.lane.b32.xlu0 %v969, 80
    %v1149 = vpop.permute.xlu0 %1148
    %v1150 = vsel %vm57, %v1149, 0
    %1152 = vmatprep.subr.mxu0 0.0
    %1153 = vmatpush1.msra.mxu0 %v43
    %1154 = vmatprep.subr.mxu0 0.0
    %1155 = vmatpush1.msra.mxu0 %v44
    %1156 = vmatprep.subr.mxu0 0.0
    %1157 = vmatpush1.msra.mxu0 0.0
    %1158 = vmatprep.subr.mxu0 0.0
    %1159 = vmatpush1.msra.mxu0 0.0
    %1160 = vmatprep.subr.mxu0 0.0
    %1161 = vmatpush1.msra.mxu0 0.0
    %1162 = vmatprep.subr.mxu0 0.0
    %1163 = vmatpush1.msra.mxu0 0.0
    %1164 = vmatprep.subr.mxu0 0.0
    %1165 = vmatpush1.msra.mxu0 0.0
    %1166 = vmatprep.subr.mxu0 0.0
    %1167 = vmatpush1.msra.mxu0 0.0
    %1168 = vmatprep.subr.mxu0 0.0
    %1169 = vmatpush1.msra.mxu0 0.0
    %1170 = vmatprep.subr.mxu0 0.0
    %1171 = vmatpush1.msra.mxu0 0.0
    %1172 = vmatprep.subr.mxu0 0.0
    %1173 = vmatpush1.msra.mxu0 0.0
    %1174 = vmatprep.subr.mxu0 0.0
    %1175 = vmatpush1.msra.mxu0 0.0
    %1176 = vmatprep.subr.mxu0 0.0
    %1177 = vmatpush1.msra.mxu0 0.0
    %1178 = vmatprep.subr.mxu0 0.0
    %1179 = vmatpush1.msra.mxu0 0.0
    %1180 = vmatprep.subr.mxu0 0.0
    %1181 = vmatpush1.msra.mxu0 0.0
    %1182 = vmatprep.subr.mxu0 0.0
    %1183 = vmatpush1.msra.mxu0 0.0
    %1184 = vmatprep.subr.mxu0 0.0
    %1185 = vmatpush1.msra.mxu0 0.0
    %1186 = vmatprep.subr.mxu0 0.0
    %1187 = vmatpush1.msra.mxu0 0.0
    %1188 = vmatprep.subr.mxu0 0.0
    %1189 = vmatpush1.msra.mxu0 0.0
    %1190 = vmatprep.subr.mxu0 0.0
    %1191 = vmatpush1.msra.mxu0 0.0
    %1192 = vmatprep.subr.mxu0 0.0
    %1193 = vmatpush1.msra.mxu0 0.0
    %1194 = vmatprep.subr.mxu0 0.0
    %1195 = vmatpush1.msra.mxu0 0.0
    %1196 = vmatprep.subr.mxu0 0.0
    %1197 = vmatpush1.msra.mxu0 0.0
    %1198 = vmatprep.subr.mxu0 0.0
    %1199 = vmatpush1.msra.mxu0 0.0
    %1200 = vmatprep.subr.mxu0 0.0
    %1201 = vmatpush1.msra.mxu0 0.0
    %1202 = vmatprep.subr.mxu0 0.0
    %1203 = vmatpush1.msra.mxu0 0.0
    %1204 = vmatprep.subr.mxu0 0.0
    %1205 = vmatpush1.msra.mxu0 0.0
    %1206 = vmatprep.subr.mxu0 0.0
    %1207 = vmatpush1.msra.mxu0 0.0
    %1208 = vmatprep.subr.mxu0 0.0
    %1209 = vmatpush1.msra.mxu0 0.0
    %1210 = vmatprep.subr.mxu0 0.0
    %1211 = vmatpush1.msra.mxu0 0.0
    %1212 = vmatprep.subr.mxu0 0.0
    %1213 = vmatpush1.msra.mxu0 0.0
    %1214 = vmatprep.subr.mxu0 0.0
    %1215 = vmatpush1.msra.mxu0 0.0
    %1216 = vmatprep.mubr.f32.mxu0 0.0
    %1217 = vmatmul.mubr.f32.gmra.mrb[0].mxu0 %v1150
    %v1218 = vpop.f32.mrb[0].mxu0
    %v1219 = vadd.f32 0.0, %v1218
    %v1220 = vpop.f32.mrb[0].mxu0
    %1221 = vdwg.mxu0
    %v1222 = vadd.f32 %v1144, %v1219
    %v1223 = vxor.u32 %v1222, 2147483648
    %v1224 = vmul.f32 %v1223, 1.442695
    %v1225 = vpow.pop %v1224
    %v1226 = vadd.f32 %v1225, 1.0
    %v1227 = vrcp.pop %v1226
    %v1228 = vmul.f32 1.0, %v1227
    %v1229 = vtanh.pop %v1222
    %v1230 = vmul.f32 %v1228, %v963
    %1232 = vrot.lane.b32.xlu0 %v1229, 96
    %v1233 = vpop.permute.xlu0 %1232
    %v1235 = vmul.f32 %v1228, %v1233
    %1237 = vrot.lane.b32.xlu0 %v1235, 16
    %v1238 = vpop.permute.xlu0 %1237
    %v1240 = vadd.f32 %v1230, %v1238
    %v1241 = vtanh.pop %v1240
    %1243 = vrot.lane.b32.xlu0 %v1241, 32
    %v1244 = vpop.permute.xlu0 %1243
    %v1246 = vmul.f32 %v1228, %v1244
    %1247 = vmatprep.subr.mxu0 0.0
    %1248 = vmatpush1.msra.mxu0 %v35
    %1249 = vmatprep.subr.mxu0 0.0
    %1250 = vmatpush1.msra.mxu0 %v36
    %1251 = vmatprep.subr.mxu0 0.0
    %1252 = vmatpush1.msra.mxu0 %v37
    %1253 = vmatprep.subr.mxu0 0.0
    %1254 = vmatpush1.msra.mxu0 %v38
    %1255 = vmatprep.subr.mxu0 0.0
    %1256 = vmatpush1.msra.mxu0 0.0
    %1257 = vmatprep.subr.mxu0 0.0
    %1258 = vmatpush1.msra.mxu0 0.0
    %1259 = vmatprep.subr.mxu0 0.0
    %1260 = vmatpush1.msra.mxu0 0.0
    %1261 = vmatprep.subr.mxu0 0.0
    %1262 = vmatpush1.msra.mxu0 0.0
    %1263 = vmatprep.subr.mxu0 0.0
    %1264 = vmatpush1.msra.mxu0 0.0
    %1265 = vmatprep.subr.mxu0 0.0
    %1266 = vmatpush1.msra.mxu0 0.0
    %1267 = vmatprep.subr.mxu0 0.0
    %1268 = vmatpush1.msra.mxu0 0.0
    %1269 = vmatprep.subr.mxu0 0.0
    %1270 = vmatpush1.msra.mxu0 0.0
    %1271 = vmatprep.subr.mxu0 0.0
    %1272 = vmatpush1.msra.mxu0 0.0
    %1273 = vmatprep.subr.mxu0 0.0
    %1274 = vmatpush1.msra.mxu0 0.0
    %1275 = vmatprep.subr.mxu0 0.0
    %1276 = vmatpush1.msra.mxu0 0.0
    %1277 = vmatprep.subr.mxu0 0.0
    %1278 = vmatpush1.msra.mxu0 0.0
    %1279 = vmatprep.subr.mxu0 0.0
    %1280 = vmatpush1.msra.mxu0 0.0
    %1281 = vmatprep.subr.mxu0 0.0
    %1282 = vmatpush1.msra.mxu0 0.0
    %1283 = vmatprep.subr.mxu0 0.0
    %1284 = vmatpush1.msra.mxu0 0.0
    %1285 = vmatprep.subr.mxu0 0.0
    %1286 = vmatpush1.msra.mxu0 0.0
    %1287 = vmatprep.subr.mxu0 0.0
    %1288 = vmatpush1.msra.mxu0 0.0
    %1289 = vmatprep.subr.mxu0 0.0
    %1290 = vmatpush1.msra.mxu0 0.0
    %1291 = vmatprep.subr.mxu0 0.0
    %1292 = vmatpush1.msra.mxu0 0.0
    %1293 = vmatprep.subr.mxu0 0.0
    %1294 = vmatpush1.msra.mxu0 0.0
    %1295 = vmatprep.subr.mxu0 0.0
    %1296 = vmatpush1.msra.mxu0 0.0
    %1297 = vmatprep.subr.mxu0 0.0
    %1298 = vmatpush1.msra.mxu0 0.0
    %1299 = vmatprep.subr.mxu0 0.0
    %1300 = vmatpush1.msra.mxu0 0.0
    %1301 = vmatprep.subr.mxu0 0.0
    %1302 = vmatpush1.msra.mxu0 0.0
    %1303 = vmatprep.subr.mxu0 0.0
    %1304 = vmatpush1.msra.mxu0 0.0
    %1305 = vmatprep.subr.mxu0 0.0
    %1306 = vmatpush1.msra.mxu0 0.0
    %1307 = vmatprep.subr.mxu0 0.0
    %1308 = vmatpush1.msra.mxu0 0.0
    %1309 = vmatprep.subr.mxu0 0.0
    %1310 = vmatpush1.msra.mxu0 0.0
    %1311 = vmatprep.mubr.f32.mxu0 0.0
    %1312 = vmatmul.mubr.f32.gmra.mrb[0].mxu0 %v1075
    %v1313 = vpop.f32.mrb[0].mxu0
    %v1314 = vadd.f32 0.0, %v1313
    %v1315 = vpop.f32.mrb[0].mxu0
    %1316 = vdwg.mxu0
    %v1317 = vadd.f32 %v136, %v1314
    %v1318 = vxor.u32 %v1317, 2147483648
    %v1319 = vmul.f32 %v1318, 1.442695
    %v1320 = vpow.pop %v1319
    %v1321 = vadd.f32 %v1320, 1.0
    %v1322 = vrcp.pop %v1321
    %v1323 = vmul.f32 1.0, %v1322
    %v1324 = vtanh.pop %v1317
    %v1326 = vrot.slane %v1064, 6
    %v1328 = vmul.f32 %v1323, %v1326
    %1330 = vrot.lane.b32.xlu0 %v1324, 64
    %v1331 = vpop.permute.xlu0 %1330
    %v1333 = vmul.f32 %v1323, %v1331
    %1335 = vrot.lane.b32.xlu0 %v1333, 32
    %v1336 = vpop.permute.xlu0 %1335
    %v1338 = vadd.f32 %v1328, %v1336
    %v1339 = vtanh.pop %v1338
    %1341 = vrot.lane.b32.xlu0 %v1339, 64
    %v1342 = vpop.permute.xlu0 %1341
    %v1344 = vmul.f32 %v1323, %v1342
    %1346 = vrot.lane.b32.xlu0 %v1344, 32
    %v1347 = vpop.permute.xlu0 %1346
    %v1348 = vsel %vm139, %v1347, 0
    %1350 = vmatprep.subr.mxu0 0.0
    %1351 = vmatpush1.msra.mxu0 %v39
    %1352 = vmatprep.subr.mxu0 0.0
    %1353 = vmatpush1.msra.mxu0 %v40
    %1354 = vmatprep.subr.mxu0 0.0
    %1355 = vmatpush1.msra.mxu0 %v41
    %1356 = vmatprep.subr.mxu0 0.0
    %1357 = vmatpush1.msra.mxu0 %v42
    %1358 = vmatprep.subr.mxu0 0.0
    %1359 = vmatpush1.msra.mxu0 0.0
    %1360 = vmatprep.subr.mxu0 0.0
    %1361 = vmatpush1.msra.mxu0 0.0
    %1362 = vmatprep.subr.mxu0 0.0
    %1363 = vmatpush1.msra.mxu0 0.0
    %1364 = vmatprep.subr.mxu0 0.0
    %1365 = vmatpush1.msra.mxu0 0.0
    %1366 = vmatprep.subr.mxu0 0.0
    %1367 = vmatpush1.msra.mxu0 0.0
    %1368 = vmatprep.subr.mxu0 0.0
    %1369 = vmatpush1.msra.mxu0 0.0
    %1370 = vmatprep.subr.mxu0 0.0
    %1371 = vmatpush1.msra.mxu0 0.0
    %1372 = vmatprep.subr.mxu0 0.0
    %1373 = vmatpush1.msra.mxu0 0.0
    %1374 = vmatprep.subr.mxu0 0.0
    %1375 = vmatpush1.msra.mxu0 0.0
    %1376 = vmatprep.subr.mxu0 0.0
    %1377 = vmatpush1.msra.mxu0 0.0
    %1378 = vmatprep.subr.mxu0 0.0
    %1379 = vmatpush1.msra.mxu0 0.0
    %1380 = vmatprep.subr.mxu0 0.0
    %1381 = vmatpush1.msra.mxu0 0.0
    %1382 = vmatprep.subr.mxu0 0.0
    %1383 = vmatpush1.msra.mxu0 0.0
    %1384 = vmatprep.subr.mxu0 0.0
    %1385 = vmatpush1.msra.mxu0 0.0
    %1386 = vmatprep.subr.mxu0 0.0
    %1387 = vmatpush1.msra.mxu0 0.0
    %1388 = vmatprep.subr.mxu0 0.0
    %1389 = vmatpush1.msra.mxu0 0.0
    %1390 = vmatprep.subr.mxu0 0.0
    %1391 = vmatpush1.msra.mxu0 0.0
    %1392 = vmatprep.subr.mxu0 0.0
    %1393 = vmatpush1.msra.mxu0 0.0
    %1394 = vmatprep.subr.mxu0 0.0
    %1395 = vmatpush1.msra.mxu0 0.0
    %1396 = vmatprep.subr.mxu0 0.0
    %1397 = vmatpush1.msra.mxu0 0.0
    %1398 = vmatprep.subr.mxu0 0.0
    %1399 = vmatpush1.msra.mxu0 0.0
    %1400 = vmatprep.subr.mxu0 0.0
    %1401 = vmatpush1.msra.mxu0 0.0
    %1402 = vmatprep.subr.mxu0 0.0
    %1403 = vmatpush1.msra.mxu0 0.0
    %1404 = vmatprep.subr.mxu0 0.0
    %1405 = vmatpush1.msra.mxu0 0.0
    %1406 = vmatprep.subr.mxu0 0.0
    %1407 = vmatpush1.msra.mxu0 0.0
    %1408 = vmatprep.subr.mxu0 0.0
    %1409 = vmatpush1.msra.mxu0 0.0
    %1410 = vmatprep.subr.mxu0 0.0
    %1411 = vmatpush1.msra.mxu0 0.0
    %1412 = vmatprep.subr.mxu0 0.0
    %1413 = vmatpush1.msra.mxu0 0.0
    %1414 = vmatprep.mubr.f32.mxu0 0.0
    %1415 = vmatmul.mubr.f32.gmra.mrb[0].mxu0 %v1348
    %v1416 = vpop.f32.mrb[0].mxu0
    %v1417 = vadd.f32 %v242, %v1416
    %v1418 = vpop.f32.mrb[0].mxu0
    %1419 = vdwg.mxu0
    %1421 = vrot.lane.b32.xlu0 %v1246, 80
    %v1422 = vpop.permute.xlu0 %1421
    %v1423 = vsel %vm57, %v1422, 0
    %1425 = vmatprep.subr.mxu0 0.0
    %1426 = vmatpush1.msra.mxu0 %v43
    %1427 = vmatprep.subr.mxu0 0.0
    %1428 = vmatpush1.msra.mxu0 %v44
    %1429 = vmatprep.subr.mxu0 0.0
    %1430 = vmatpush1.msra.mxu0 0.0
    %1431 = vmatprep.subr.mxu0 0.0
    %1432 = vmatpush1.msra.mxu0 0.0
    %1433 = vmatprep.subr.mxu0 0.0
    %1434 = vmatpush1.msra.mxu0 0.0
    %1435 = vmatprep.subr.mxu0 0.0
    %1436 = vmatpush1.msra.mxu0 0.0
    %1437 = vmatprep.subr.mxu0 0.0
    %1438 = vmatpush1.msra.mxu0 0.0
    %1439 = vmatprep.subr.mxu0 0.0
    %1440 = vmatpush1.msra.mxu0 0.0
    %1441 = vmatprep.subr.mxu0 0.0
    %1442 = vmatpush1.msra.mxu0 0.0
    %1443 = vmatprep.subr.mxu0 0.0
    %1444 = vmatpush1.msra.mxu0 0.0
    %1445 = vmatprep.subr.mxu0 0.0
    %1446 = vmatpush1.msra.mxu0 0.0
    %1447 = vmatprep.subr.mxu0 0.0
    %1448 = vmatpush1.msra.mxu0 0.0
    %1449 = vmatprep.subr.mxu0 0.0
    %1450 = vmatpush1.msra.mxu0 0.0
    %1451 = vmatprep.subr.mxu0 0.0
    %1452 = vmatpush1.msra.mxu0 0.0
    %1453 = vmatprep.subr.mxu0 0.0
    %1454 = vmatpush1.msra.mxu0 0.0
    %1455 = vmatprep.subr.mxu0 0.0
    %1456 = vmatpush1.msra.mxu0 0.0
    %1457 = vmatprep.subr.mxu0 0.0
    %1458 = vmatpush1.msra.mxu0 0.0
    %1459 = vmatprep.subr.mxu0 0.0
    %1460 = vmatpush1.msra.mxu0 0.0
    %1461 = vmatprep.subr.mxu0 0.0
    %1462 = vmatpush1.msra.mxu0 0.0
    %1463 = vmatprep.subr.mxu0 0.0
    %1464 = vmatpush1.msra.mxu0 0.0
    %1465 = vmatprep.subr.mxu0 0.0
    %1466 = vmatpush1.msra.mxu0 0.0
    %1467 = vmatprep.subr.mxu0 0.0
    %1468 = vmatpush1.msra.mxu0 0.0
    %1469 = vmatprep.subr.mxu0 0.0
    %1470 = vmatpush1.msra.mxu0 0.0
    %1471 = vmatprep.subr.mxu0 0.0
    %1472 = vmatpush1.msra.mxu0 0.0
    %1473 = vmatprep.subr.mxu0 0.0
    %1474 = vmatpush1.msra.mxu0 0.0
    %1475 = vmatprep.subr.mxu0 0.0
    %1476 = vmatpush1.msra.mxu0 0.0
    %1477 = vmatprep.subr.mxu0 0.0
    %1478 = vmatpush1.msra.mxu0 0.0
    %1479 = vmatprep.subr.mxu0 0.0
    %1480 = vmatpush1.msra.mxu0 0.0
    %1481 = vmatprep.subr.mxu0 0.0
    %1482 = vmatpush1.msra.mxu0 0.0
    %1483 = vmatprep.subr.mxu0 0.0
    %1484 = vmatpush1.msra.mxu0 0.0
    %1485 = vmatprep.subr.mxu0 0.0
    %1486 = vmatpush1.msra.mxu0 0.0
    %1487 = vmatprep.subr.mxu0 0.0
    %1488 = vmatpush1.msra.mxu0 0.0
    %1489 = vmatprep.mubr.f32.mxu0 0.0
    %1490 = vmatmul.mubr.f32.gmra.mrb[0].mxu0 %v1423
    %v1491 = vpop.f32.mrb[0].mxu0
    %v1492 = vadd.f32 0.0, %v1491
    %v1493 = vpop.f32.mrb[0].mxu0
    %1494 = vdwg.mxu0
    %v1495 = vadd.f32 %v1417, %v1492
    %v1496 = vxor.u32 %v1495, 2147483648
    %v1497 = vmul.f32 %v1496, 1.442695
    %v1498 = vpow.pop %v1497
    %v1499 = vadd.f32 %v1498, 1.0
    %v1500 = vrcp.pop %v1499
    %v1501 = vmul.f32 1.0, %v1500
    %v1502 = vtanh.pop %v1495
    %v1503 = vmul.f32 %v1501, %v1240
    %1505 = vrot.lane.b32.xlu0 %v1502, 96
    %v1506 = vpop.permute.xlu0 %1505
    %v1508 = vmul.f32 %v1501, %v1506
    %1510 = vrot.lane.b32.xlu0 %v1508, 16
    %v1511 = vpop.permute.xlu0 %1510
    %v1513 = vadd.f32 %v1503, %v1511
    %v1514 = vtanh.pop %v1513
    %1516 = vrot.lane.b32.xlu0 %v1514, 32
    %v1517 = vpop.permute.xlu0 %1516
    %v1519 = vmul.f32 %v1501, %v1517
    %1520 = vmatprep.subr.mxu0 0.0
    %1521 = vmatpush1.msra.mxu0 %v35
    %1522 = vmatprep.subr.mxu0 0.0
    %1523 = vmatpush1.msra.mxu0 %v36
    %1524 = vmatprep.subr.mxu0 0.0
    %1525 = vmatpush1.msra.mxu0 %v37
    %1526 = vmatprep.subr.mxu0 0.0
    %1527 = vmatpush1.msra.mxu0 %v38
    %1528 = vmatprep.subr.mxu0 0.0
    %1529 = vmatpush1.msra.mxu0 0.0
    %1530 = vmatprep.subr.mxu0 0.0
    %1531 = vmatpush1.msra.mxu0 0.0
    %1532 = vmatprep.subr.mxu0 0.0
    %1533 = vmatpush1.msra.mxu0 0.0
    %1534 = vmatprep.subr.mxu0 0.0
    %1535 = vmatpush1.msra.mxu0 0.0
    %1536 = vmatprep.subr.mxu0 0.0
    %1537 = vmatpush1.msra.mxu0 0.0
    %1538 = vmatprep.subr.mxu0 0.0
    %1539 = vmatpush1.msra.mxu0 0.0
    %1540 = vmatprep.subr.mxu0 0.0
    %1541 = vmatpush1.msra.mxu0 0.0
    %1542 = vmatprep.subr.mxu0 0.0
    %1543 = vmatpush1.msra.mxu0 0.0
    %1544 = vmatprep.subr.mxu0 0.0
    %1545 = vmatpush1.msra.mxu0 0.0
    %1546 = vmatprep.subr.mxu0 0.0
    %1547 = vmatpush1.msra.mxu0 0.0
    %1548 = vmatprep.subr.mxu0 0.0
    %1549 = vmatpush1.msra.mxu0 0.0
    %1550 = vmatprep.subr.mxu0 0.0
    %1551 = vmatpush1.msra.mxu0 0.0
    %1552 = vmatprep.subr.mxu0 0.0
    %1553 = vmatpush1.msra.mxu0 0.0
    %1554 = vmatprep.subr.mxu0 0.0
    %1555 = vmatpush1.msra.mxu0 0.0
    %1556 = vmatprep.subr.mxu0 0.0
    %1557 = vmatpush1.msra.mxu0 0.0
    %1558 = vmatprep.subr.mxu0 0.0
    %1559 = vmatpush1.msra.mxu0 0.0
    %1560 = vmatprep.subr.mxu0 0.0
    %1561 = vmatpush1.msra.mxu0 0.0
    %1562 = vmatprep.subr.mxu0 0.0
    %1563 = vmatpush1.msra.mxu0 0.0
    %1564 = vmatprep.subr.mxu0 0.0
    %1565 = vmatpush1.msra.mxu0 0.0
    %1566 = vmatprep.subr.mxu0 0.0
    %1567 = vmatpush1.msra.mxu0 0.0
    %1568 = vmatprep.subr.mxu0 0.0
    %1569 = vmatpush1.msra.mxu0 0.0
    %1570 = vmatprep.subr.mxu0 0.0
    %1571 = vmatpush1.msra.mxu0 0.0
    %1572 = vmatprep.subr.mxu0 0.0
    %1573 = vmatpush1.msra.mxu0 0.0
    %1574 = vmatprep.subr.mxu0 0.0
    %1575 = vmatpush1.msra.mxu0 0.0
    %1576 = vmatprep.subr.mxu0 0.0
    %1577 = vmatpush1.msra.mxu0 0.0
    %1578 = vmatprep.subr.mxu0 0.0
    %1579 = vmatpush1.msra.mxu0 0.0
    %1580 = vmatprep.subr.mxu0 0.0
    %1581 = vmatpush1.msra.mxu0 0.0
    %1582 = vmatprep.subr.mxu0 0.0
    %1583 = vmatpush1.msra.mxu0 0.0
    %1584 = vmatprep.mubr.f32.mxu0 0.0
    %1585 = vmatmul.mubr.f32.gmra.mrb[0].mxu0 %v1348
    %v1586 = vpop.f32.mrb[0].mxu0
    %v1587 = vadd.f32 0.0, %v1586
    %v1588 = vpop.f32.mrb[0].mxu0
    %1589 = vdwg.mxu0
    %v1591 = vrot.slane %v1587, 6
    %v1593 = vadd.f32 %v136, %v1591
    %v1594 = vxor.u32 %v1593, 2147483648
    %v1595 = vmul.f32 %v1594, 1.442695
    %v1596 = vpow.pop %v1595
    %v1597 = vadd.f32 %v1596, 1.0
    %v1598 = vrcp.pop %v1597
    %v1599 = vmul.f32 1.0, %v1598
    %v1600 = vtanh.pop %v1593
    %v1602 = vrot.slane %v1338, 6
    %v1604 = vmul.f32 %v1599, %v1602
    %1606 = vrot.lane.b32.xlu0 %v1600, 64
    %v1607 = vpop.permute.xlu0 %1606
    %v1609 = vmul.f32 %v1599, %v1607
    %1611 = vrot.lane.b32.xlu0 %v1609, 32
    %v1612 = vpop.permute.xlu0 %1611
    %v1614 = vadd.f32 %v1604, %v1612
    %v1615 = vtanh.pop %v1614
    %1617 = vrot.lane.b32.xlu0 %v1615, 64
    %v1618 = vpop.permute.xlu0 %1617
    %v1620 = vmul.f32 %v1599, %v1618
    %v1622 = vrot.slane %v1620, 2
    %1623 = vrot.lane.b32.xlu0 %v1622, 32
    %v1624 = vpop.permute.xlu0 %1623
    %v1625 = vsel %vm139, %v1624, 0
    %1627 = vmatprep.subr.mxu0 0.0
    %1628 = vmatpush1.msra.mxu0 %v39
    %1629 = vmatprep.subr.mxu0 0.0
    %1630 = vmatpush1.msra.mxu0 %v40
    %1631 = vmatprep.subr.mxu0 0.0
    %1632 = vmatpush1.msra.mxu0 %v41
    %1633 = vmatprep.subr.mxu0 0.0
    %1634 = vmatpush1.msra.mxu0 %v42
    %1635 = vmatprep.subr.mxu0 0.0
    %1636 = vmatpush1.msra.mxu0 0.0
    %1637 = vmatprep.subr.mxu0 0.0
    %1638 = vmatpush1.msra.mxu0 0.0
    %1639 = vmatprep.subr.mxu0 0.0
    %1640 = vmatpush1.msra.mxu0 0.0
    %1641 = vmatprep.subr.mxu0 0.0
    %1642 = vmatpush1.msra.mxu0 0.0
    %1643 = vmatprep.subr.mxu0 0.0
    %1644 = vmatpush1.msra.mxu0 0.0
    %1645 = vmatprep.subr.mxu0 0.0
    %1646 = vmatpush1.msra.mxu0 0.0
    %1647 = vmatprep.subr.mxu0 0.0
    %1648 = vmatpush1.msra.mxu0 0.0
    %1649 = vmatprep.subr.mxu0 0.0
    %1650 = vmatpush1.msra.mxu0 0.0
    %1651 = vmatprep.subr.mxu0 0.0
    %1652 = vmatpush1.msra.mxu0 0.0
    %1653 = vmatprep.subr.mxu0 0.0
    %1654 = vmatpush1.msra.mxu0 0.0
    %1655 = vmatprep.subr.mxu0 0.0
    %1656 = vmatpush1.msra.mxu0 0.0
    %1657 = vmatprep.subr.mxu0 0.0
    %1658 = vmatpush1.msra.mxu0 0.0
    %1659 = vmatprep.subr.mxu0 0.0
    %1660 = vmatpush1.msra.mxu0 0.0
    %1661 = vmatprep.subr.mxu0 0.0
    %1662 = vmatpush1.msra.mxu0 0.0
    %1663 = vmatprep.subr.mxu0 0.0
    %1664 = vmatpush1.msra.mxu0 0.0
    %1665 = vmatprep.subr.mxu0 0.0
    %1666 = vmatpush1.msra.mxu0 0.0
    %1667 = vmatprep.subr.mxu0 0.0
    %1668 = vmatpush1.msra.mxu0 0.0
    %1669 = vmatprep.subr.mxu0 0.0
    %1670 = vmatpush1.msra.mxu0 0.0
    %1671 = vmatprep.subr.mxu0 0.0
    %1672 = vmatpush1.msra.mxu0 0.0
    %1673 = vmatprep.subr.mxu0 0.0
    %1674 = vmatpush1.msra.mxu0 0.0
    %1675 = vmatprep.subr.mxu0 0.0
    %1676 = vmatpush1.msra.mxu0 0.0
    %1677 = vmatprep.subr.mxu0 0.0
    %1678 = vmatpush1.msra.mxu0 0.0
    %1679 = vmatprep.subr.mxu0 0.0
    %1680 = vmatpush1.msra.mxu0 0.0
    %1681 = vmatprep.subr.mxu0 0.0
    %1682 = vmatpush1.msra.mxu0 0.0
    %1683 = vmatprep.subr.mxu0 0.0
    %1684 = vmatpush1.msra.mxu0 0.0
    %1685 = vmatprep.subr.mxu0 0.0
    %1686 = vmatpush1.msra.mxu0 0.0
    %1687 = vmatprep.subr.mxu0 0.0
    %1688 = vmatpush1.msra.mxu0 0.0
    %1689 = vmatprep.subr.mxu0 0.0
    %1690 = vmatpush1.msra.mxu0 0.0
    %1691 = vmatprep.mubr.f32.mxu0 0.0
    %1692 = vmatmul.mubr.f32.gmra.mrb[0].mxu0 %v1625
    %v1693 = vpop.f32.mrb[0].mxu0
    %v1694 = vadd.f32 %v242, %v1693
    %v1695 = vpop.f32.mrb[0].mxu0
    %1696 = vdwg.mxu0
    %1698 = vrot.lane.b32.xlu0 %v1519, 80
    %v1699 = vpop.permute.xlu0 %1698
    %v1700 = vsel %vm57, %v1699, 0
    %1702 = vmatprep.subr.mxu0 0.0
    %1703 = vmatpush1.msra.mxu0 %v43
    %1704 = vmatprep.subr.mxu0 0.0
    %1705 = vmatpush1.msra.mxu0 %v44
    %1706 = vmatprep.subr.mxu0 0.0
    %1707 = vmatpush1.msra.mxu0 0.0
    %1708 = vmatprep.subr.mxu0 0.0
    %1709 = vmatpush1.msra.mxu0 0.0
    %1710 = vmatprep.subr.mxu0 0.0
    %1711 = vmatpush1.msra.mxu0 0.0
    %1712 = vmatprep.subr.mxu0 0.0
    %1713 = vmatpush1.msra.mxu0 0.0
    %1714 = vmatprep.subr.mxu0 0.0
    %1715 = vmatpush1.msra.mxu0 0.0
    %1716 = vmatprep.subr.mxu0 0.0
    %1717 = vmatpush1.msra.mxu0 0.0
    %1718 = vmatprep.subr.mxu0 0.0
    %1719 = vmatpush1.msra.mxu0 0.0
    %1720 = vmatprep.subr.mxu0 0.0
    %1721 = vmatpush1.msra.mxu0 0.0
    %1722 = vmatprep.subr.mxu0 0.0
    %1723 = vmatpush1.msra.mxu0 0.0
    %1724 = vmatprep.subr.mxu0 0.0
    %1725 = vmatpush1.msra.mxu0 0.0
    %1726 = vmatprep.subr.mxu0 0.0
    %1727 = vmatpush1.msra.mxu0 0.0
    %1728 = vmatprep.subr.mxu0 0.0
    %1729 = vmatpush1.msra.mxu0 0.0
    %1730 = vmatprep.subr.mxu0 0.0
    %1731 = vmatpush1.msra.mxu0 0.0
    %1732 = vmatprep.subr.mxu0 0.0
    %1733 = vmatpush1.msra.mxu0 0.0
    %1734 = vmatprep.subr.mxu0 0.0
    %1735 = vmatpush1.msra.mxu0 0.0
    %1736 = vmatprep.subr.mxu0 0.0
    %1737 = vmatpush1.msra.mxu0 0.0
    %1738 = vmatprep.subr.mxu0 0.0
    %1739 = vmatpush1.msra.mxu0 0.0
    %1740 = vmatprep.subr.mxu0 0.0
    %1741 = vmatpush1.msra.mxu0 0.0
    %1742 = vmatprep.subr.mxu0 0.0
    %1743 = vmatpush1.msra.mxu0 0.0
    %1744 = vmatprep.subr.mxu0 0.0
    %1745 = vmatpush1.msra.mxu0 0.0
    %1746 = vmatprep.subr.mxu0 0.0
    %1747 = vmatpush1.msra.mxu0 0.0
    %1748 = vmatprep.subr.mxu0 0.0
    %1749 = vmatpush1.msra.mxu0 0.0
    %1750 = vmatprep.subr.mxu0 0.0
    %1751 = vmatpush1.msra.mxu0 0.0
    %1752 = vmatprep.subr.mxu0 0.0
    %1753 = vmatpush1.msra.mxu0 0.0
    %1754 = vmatprep.subr.mxu0 0.0
    %1755 = vmatpush1.msra.mxu0 0.0
    %1756 = vmatprep.subr.mxu0 0.0
    %1757 = vmatpush1.msra.mxu0 0.0
    %1758 = vmatprep.subr.mxu0 0.0
    %1759 = vmatpush1.msra.mxu0 0.0
    %1760 = vmatprep.subr.mxu0 0.0
    %1761 = vmatpush1.msra.mxu0 0.0
    %1762 = vmatprep.subr.mxu0 0.0
    %1763 = vmatpush1.msra.mxu0 0.0
    %1764 = vmatprep.subr.mxu0 0.0
    %1765 = vmatpush1.msra.mxu0 0.0
    %1766 = vmatprep.mubr.f32.mxu0 0.0
    %1767 = vmatmul.mubr.f32.gmra.mrb[0].mxu0 %v1700
    %v1768 = vpop.f32.mrb[0].mxu0
    %v1769 = vadd.f32 0.0, %v1768
    %v1770 = vpop.f32.mrb[0].mxu0
    %1771 = vdwg.mxu0
    %v1772 = vadd.f32 %v1694, %v1769
    %v1773 = vxor.u32 %v1772, 2147483648
    %v1774 = vmul.f32 %v1773, 1.442695
    %v1775 = vpow.pop %v1774
    %v1776 = vadd.f32 %v1775, 1.0
    %v1777 = vrcp.pop %v1776
    %v1778 = vmul.f32 1.0, %v1777
    %v1779 = vtanh.pop %v1772
    %v1780 = vmul.f32 %v1778, %v1513
    %1782 = vrot.lane.b32.xlu0 %v1779, 96
    %v1783 = vpop.permute.xlu0 %1782
    %v1785 = vmul.f32 %v1778, %v1783
    %1787 = vrot.lane.b32.xlu0 %v1785, 16
    %v1788 = vpop.permute.xlu0 %1787
    %v1790 = vadd.f32 %v1780, %v1788
    %v1791 = vtanh.pop %v1790
    %1793 = vrot.lane.b32.xlu0 %v1791, 32
    %v1794 = vpop.permute.xlu0 %1793
    %v1796 = vmul.f32 %v1778, %v1794
    %1797 = vmatprep.subr.mxu0 0.0
    %1798 = vmatpush1.msra.mxu0 %v35
    %1799 = vmatprep.subr.mxu0 0.0
    %1800 = vmatpush1.msra.mxu0 %v36
    %1801 = vmatprep.subr.mxu0 0.0
    %1802 = vmatpush1.msra.mxu0 %v37
    %1803 = vmatprep.subr.mxu0 0.0
    %1804 = vmatpush1.msra.mxu0 %v38
    %1805 = vmatprep.subr.mxu0 0.0
    %1806 = vmatpush1.msra.mxu0 0.0
    %1807 = vmatprep.subr.mxu0 0.0
    %1808 = vmatpush1.msra.mxu0 0.0
    %1809 = vmatprep.subr.mxu0 0.0
    %1810 = vmatpush1.msra.mxu0 0.0
    %1811 = vmatprep.subr.mxu0 0.0
    %1812 = vmatpush1.msra.mxu0 0.0
    %1813 = vmatprep.subr.mxu0 0.0
    %1814 = vmatpush1.msra.mxu0 0.0
    %1815 = vmatprep.subr.mxu0 0.0
    %1816 = vmatpush1.msra.mxu0 0.0
    %1817 = vmatprep.subr.mxu0 0.0
    %1818 = vmatpush1.msra.mxu0 0.0
    %1819 = vmatprep.subr.mxu0 0.0
    %1820 = vmatpush1.msra.mxu0 0.0
    %1821 = vmatprep.subr.mxu0 0.0
    %1822 = vmatpush1.msra.mxu0 0.0
    %1823 = vmatprep.subr.mxu0 0.0
    %1824 = vmatpush1.msra.mxu0 0.0
    %1825 = vmatprep.subr.mxu0 0.0
    %1826 = vmatpush1.msra.mxu0 0.0
    %1827 = vmatprep.subr.mxu0 0.0
    %1828 = vmatpush1.msra.mxu0 0.0
    %1829 = vmatprep.subr.mxu0 0.0
    %1830 = vmatpush1.msra.mxu0 0.0
    %1831 = vmatprep.subr.mxu0 0.0
    %1832 = vmatpush1.msra.mxu0 0.0
    %1833 = vmatprep.subr.mxu0 0.0
    %1834 = vmatpush1.msra.mxu0 0.0
    %1835 = vmatprep.subr.mxu0 0.0
    %1836 = vmatpush1.msra.mxu0 0.0
    %1837 = vmatprep.subr.mxu0 0.0
    %1838 = vmatpush1.msra.mxu0 0.0
    %1839 = vmatprep.subr.mxu0 0.0
    %1840 = vmatpush1.msra.mxu0 0.0
    %1841 = vmatprep.subr.mxu0 0.0
    %1842 = vmatpush1.msra.mxu0 0.0
    %1843 = vmatprep.subr.mxu0 0.0
    %1844 = vmatpush1.msra.mxu0 0.0
    %1845 = vmatprep.subr.mxu0 0.0
    %1846 = vmatpush1.msra.mxu0 0.0
    %1847 = vmatprep.subr.mxu0 0.0
    %1848 = vmatpush1.msra.mxu0 0.0
    %1849 = vmatprep.subr.mxu0 0.0
    %1850 = vmatpush1.msra.mxu0 0.0
    %1851 = vmatprep.subr.mxu0 0.0
    %1852 = vmatpush1.msra.mxu0 0.0
    %1853 = vmatprep.subr.mxu0 0.0
    %1854 = vmatpush1.msra.mxu0 0.0
    %1855 = vmatprep.subr.mxu0 0.0
    %1856 = vmatpush1.msra.mxu0 0.0
    %1857 = vmatprep.subr.mxu0 0.0
    %1858 = vmatpush1.msra.mxu0 0.0
    %1859 = vmatprep.subr.mxu0 0.0
    %1860 = vmatpush1.msra.mxu0 0.0
    %1861 = vmatprep.mubr.f32.mxu0 0.0
    %1862 = vmatmul.mubr.f32.gmra.mrb[0].mxu0 %v1625
    %v1863 = vpop.f32.mrb[0].mxu0
    %v1864 = vadd.f32 0.0, %v1863
    %v1865 = vpop.f32.mrb[0].mxu0
    %1866 = vdwg.mxu0
    %v1868 = vrot.slane %v1864, 4
    %v1870 = vadd.f32 %v136, %v1868
    %v1871 = vxor.u32 %v1870, 2147483648
    %v1872 = vmul.f32 %v1871, 1.442695
    %v1873 = vpow.pop %v1872
    %v1874 = vadd.f32 %v1873, 1.0
    %v1875 = vrcp.pop %v1874
    %v1876 = vmul.f32 1.0, %v1875
    %v1877 = vtanh.pop %v1870
    %v1879 = vrot.slane %v1614, 6
    %v1881 = vmul.f32 %v1876, %v1879
    %1883 = vrot.lane.b32.xlu0 %v1877, 64
    %v1884 = vpop.permute.xlu0 %1883
    %v1886 = vmul.f32 %v1876, %v1884
    %1888 = vrot.lane.b32.xlu0 %v1886, 32
    %v1889 = vpop.permute.xlu0 %1888
    %v1891 = vadd.f32 %v1881, %v1889
    %v1892 = vtanh.pop %v1891
    %1894 = vrot.lane.b32.xlu0 %v1892, 64
    %v1895 = vpop.permute.xlu0 %1894
    %v1897 = vmul.f32 %v1876, %v1895
    %v1899 = vrot.slane %v1897, 4
    %1900 = vrot.lane.b32.xlu0 %v1899, 32
    %v1901 = vpop.permute.xlu0 %1900
    %v1902 = vsel %vm139, %v1901, 0
    %1904 = vmatprep.subr.mxu0 0.0
    %1905 = vmatpush1.msra.mxu0 %v39
    %1906 = vmatprep.subr.mxu0 0.0
    %1907 = vmatpush1.msra.mxu0 %v40
    %1908 = vmatprep.subr.mxu0 0.0
    %1909 = vmatpush1.msra.mxu0 %v41
    %1910 = vmatprep.subr.mxu0 0.0
    %1911 = vmatpush1.msra.mxu0 %v42
    %1912 = vmatprep.subr.mxu0 0.0
    %1913 = vmatpush1.msra.mxu0 0.0
    %1914 = vmatprep.subr.mxu0 0.0
    %1915 = vmatpush1.msra.mxu0 0.0
    %1916 = vmatprep.subr.mxu0 0.0
    %1917 = vmatpush1.msra.mxu0 0.0
    %1918 = vmatprep.subr.mxu0 0.0
    %1919 = vmatpush1.msra.mxu0 0.0
    %1920 = vmatprep.subr.mxu0 0.0
    %1921 = vmatpush1.msra.mxu0 0.0
    %1922 = vmatprep.subr.mxu0 0.0
    %1923 = vmatpush1.msra.mxu0 0.0
    %1924 = vmatprep.subr.mxu0 0.0
    %1925 = vmatpush1.msra.mxu0 0.0
    %1926 = vmatprep.subr.mxu0 0.0
    %1927 = vmatpush1.msra.mxu0 0.0
    %1928 = vmatprep.subr.mxu0 0.0
    %1929 = vmatpush1.msra.mxu0 0.0
    %1930 = vmatprep.subr.mxu0 0.0
    %1931 = vmatpush1.msra.mxu0 0.0
    %1932 = vmatprep.subr.mxu0 0.0
    %1933 = vmatpush1.msra.mxu0 0.0
    %1934 = vmatprep.subr.mxu0 0.0
    %1935 = vmatpush1.msra.mxu0 0.0
    %1936 = vmatprep.subr.mxu0 0.0
    %1937 = vmatpush1.msra.mxu0 0.0
    %1938 = vmatprep.subr.mxu0 0.0
    %1939 = vmatpush1.msra.mxu0 0.0
    %1940 = vmatprep.subr.mxu0 0.0
    %1941 = vmatpush1.msra.mxu0 0.0
    %1942 = vmatprep.subr.mxu0 0.0
    %1943 = vmatpush1.msra.mxu0 0.0
    %1944 = vmatprep.subr.mxu0 0.0
    %1945 = vmatpush1.msra.mxu0 0.0
    %1946 = vmatprep.subr.mxu0 0.0
    %1947 = vmatpush1.msra.mxu0 0.0
    %1948 = vmatprep.subr.mxu0 0.0
    %1949 = vmatpush1.msra.mxu0 0.0
    %1950 = vmatprep.subr.mxu0 0.0
    %1951 = vmatpush1.msra.mxu0 0.0
    %1952 = vmatprep.subr.mxu0 0.0
    %1953 = vmatpush1.msra.mxu0 0.0
    %1954 = vmatprep.subr.mxu0 0.0
    %1955 = vmatpush1.msra.mxu0 0.0
    %1956 = vmatprep.subr.mxu0 0.0
    %1957 = vmatpush1.msra.mxu0 0.0
    %1958 = vmatprep.subr.mxu0 0.0
    %1959 = vmatpush1.msra.mxu0 0.0
    %1960 = vmatprep.subr.mxu0 0.0
    %1961 = vmatpush1.msra.mxu0 0.0
    %1962 = vmatprep.subr.mxu0 0.0
    %1963 = vmatpush1.msra.mxu0 0.0
    %1964 = vmatprep.subr.mxu0 0.0
    %1965 = vmatpush1.msra.mxu0 0.0
    %1966 = vmatprep.subr.mxu0 0.0
    %1967 = vmatpush1.msra.mxu0 0.0
    %1968 = vmatprep.mubr.f32.mxu0 0.0
    %1969 = vmatmul.mubr.f32.gmra.mrb[0].mxu0 %v1902
    %v1970 = vpop.f32.mrb[0].mxu0
    %v1971 = vadd.f32 %v242, %v1970
    %v1972 = vpop.f32.mrb[0].mxu0
    %1973 = vdwg.mxu0
    %1975 = vrot.lane.b32.xlu0 %v1796, 80
    %v1976 = vpop.permute.xlu0 %1975
    %v1977 = vsel %vm57, %v1976, 0
    %1979 = vmatprep.subr.mxu0 0.0
    %1980 = vmatpush1.msra.mxu0 %v43
    %1981 = vmatprep.subr.mxu0 0.0
    %1982 = vmatpush1.msra.mxu0 %v44
    %1983 = vmatprep.subr.mxu0 0.0
    %1984 = vmatpush1.msra.mxu0 0.0
    %1985 = vmatprep.subr.mxu0 0.0
    %1986 = vmatpush1.msra.mxu0 0.0
    %1987 = vmatprep.subr.mxu0 0.0
    %1988 = vmatpush1.msra.mxu0 0.0
    %1989 = vmatprep.subr.mxu0 0.0
    %1990 = vmatpush1.msra.mxu0 0.0
    %1991 = vmatprep.subr.mxu0 0.0
    %1992 = vmatpush1.msra.mxu0 0.0
    %1993 = vmatprep.subr.mxu0 0.0
    %1994 = vmatpush1.msra.mxu0 0.0
    %1995 = vmatprep.subr.mxu0 0.0
    %1996 = vmatpush1.msra.mxu0 0.0
    %1997 = vmatprep.subr.mxu0 0.0
    %1998 = vmatpush1.msra.mxu0 0.0
    %1999 = vmatprep.subr.mxu0 0.0
    %2000 = vmatpush1.msra.mxu0 0.0
    %2001 = vmatprep.subr.mxu0 0.0
    %2002 = vmatpush1.msra.mxu0 0.0
    %2003 = vmatprep.subr.mxu0 0.0
    %2004 = vmatpush1.msra.mxu0 0.0
    %2005 = vmatprep.subr.mxu0 0.0
    %2006 = vmatpush1.msra.mxu0 0.0
    %2007 = vmatprep.subr.mxu0 0.0
    %2008 = vmatpush1.msra.mxu0 0.0
    %2009 = vmatprep.subr.mxu0 0.0
    %2010 = vmatpush1.msra.mxu0 0.0
    %2011 = vmatprep.subr.mxu0 0.0
    %2012 = vmatpush1.msra.mxu0 0.0
    %2013 = vmatprep.subr.mxu0 0.0
    %2014 = vmatpush1.msra.mxu0 0.0
    %2015 = vmatprep.subr.mxu0 0.0
    %2016 = vmatpush1.msra.mxu0 0.0
    %2017 = vmatprep.subr.mxu0 0.0
    %2018 = vmatpush1.msra.mxu0 0.0
    %2019 = vmatprep.subr.mxu0 0.0
    %2020 = vmatpush1.msra.mxu0 0.0
    %2021 = vmatprep.subr.mxu0 0.0
    %2022 = vmatpush1.msra.mxu0 0.0
    %2023 = vmatprep.subr.mxu0 0.0
    %2024 = vmatpush1.msra.mxu0 0.0
    %2025 = vmatprep.subr.mxu0 0.0
    %2026 = vmatpush1.msra.mxu0 0.0
    %2027 = vmatprep.subr.mxu0 0.0
    %2028 = vmatpush1.msra.mxu0 0.0
    %2029 = vmatprep.subr.mxu0 0.0
    %2030 = vmatpush1.msra.mxu0 0.0
    %2031 = vmatprep.subr.mxu0 0.0
    %2032 = vmatpush1.msra.mxu0 0.0
    %2033 = vmatprep.subr.mxu0 0.0
    %2034 = vmatpush1.msra.mxu0 0.0
    %2035 = vmatprep.subr.mxu0 0.0
    %2036 = vmatpush1.msra.mxu0 0.0
    %2037 = vmatprep.subr.mxu0 0.0
    %2038 = vmatpush1.msra.mxu0 0.0
    %2039 = vmatprep.subr.mxu0 0.0
    %2040 = vmatpush1.msra.mxu0 0.0
    %2041 = vmatprep.subr.mxu0 0.0
    %2042 = vmatpush1.msra.mxu0 0.0
    %2043 = vmatprep.mubr.f32.mxu0 0.0
    %2044 = vmatmul.mubr.f32.gmra.mrb[0].mxu0 %v1977
    %v2045 = vpop.f32.mrb[0].mxu0
    %v2046 = vadd.f32 0.0, %v2045
    %v2047 = vpop.f32.mrb[0].mxu0
    %2048 = vdwg.mxu0
    %v2049 = vadd.f32 %v1971, %v2046
    %v2050 = vxor.u32 %v2049, 2147483648
    %v2051 = vmul.f32 %v2050, 1.442695
    %v2052 = vpow.pop %v2051
    %v2053 = vadd.f32 %v2052, 1.0
    %v2054 = vrcp.pop %v2053
    %v2055 = vmul.f32 1.0, %v2054
    %v2056 = vtanh.pop %v2049
    %v2057 = vmul.f32 %v2055, %v1790
    %2059 = vrot.lane.b32.xlu0 %v2056, 96
    %v2060 = vpop.permute.xlu0 %2059
    %v2062 = vmul.f32 %v2055, %v2060
    %2064 = vrot.lane.b32.xlu0 %v2062, 16
    %v2065 = vpop.permute.xlu0 %2064
    %v2067 = vadd.f32 %v2057, %v2065
    %v2068 = vtanh.pop %v2067
    %2070 = vrot.lane.b32.xlu0 %v2068, 32
    %v2071 = vpop.permute.xlu0 %2070
    %v2073 = vmul.f32 %v2055, %v2071
    %2074 = vmatprep.subr.mxu0 0.0
    %2075 = vmatpush1.msra.mxu0 %v35
    %2076 = vmatprep.subr.mxu0 0.0
    %2077 = vmatpush1.msra.mxu0 %v36
    %2078 = vmatprep.subr.mxu0 0.0
    %2079 = vmatpush1.msra.mxu0 %v37
    %2080 = vmatprep.subr.mxu0 0.0
    %2081 = vmatpush1.msra.mxu0 %v38
    %2082 = vmatprep.subr.mxu0 0.0
    %2083 = vmatpush1.msra.mxu0 0.0
    %2084 = vmatprep.subr.mxu0 0.0
    %2085 = vmatpush1.msra.mxu0 0.0
    %2086 = vmatprep.subr.mxu0 0.0
    %2087 = vmatpush1.msra.mxu0 0.0
    %2088 = vmatprep.subr.mxu0 0.0
    %2089 = vmatpush1.msra.mxu0 0.0
    %2090 = vmatprep.subr.mxu0 0.0
    %2091 = vmatpush1.msra.mxu0 0.0
    %2092 = vmatprep.subr.mxu0 0.0
    %2093 = vmatpush1.msra.mxu0 0.0
    %2094 = vmatprep.subr.mxu0 0.0
    %2095 = vmatpush1.msra.mxu0 0.0
    %2096 = vmatprep.subr.mxu0 0.0
    %2097 = vmatpush1.msra.mxu0 0.0
    %2098 = vmatprep.subr.mxu0 0.0
    %2099 = vmatpush1.msra.mxu0 0.0
    %2100 = vmatprep.subr.mxu0 0.0
    %2101 = vmatpush1.msra.mxu0 0.0
    %2102 = vmatprep.subr.mxu0 0.0
    %2103 = vmatpush1.msra.mxu0 0.0
    %2104 = vmatprep.subr.mxu0 0.0
    %2105 = vmatpush1.msra.mxu0 0.0
    %2106 = vmatprep.subr.mxu0 0.0
    %2107 = vmatpush1.msra.mxu0 0.0
    %2108 = vmatprep.subr.mxu0 0.0
    %2109 = vmatpush1.msra.mxu0 0.0
    %2110 = vmatprep.subr.mxu0 0.0
    %2111 = vmatpush1.msra.mxu0 0.0
    %2112 = vmatprep.subr.mxu0 0.0
    %2113 = vmatpush1.msra.mxu0 0.0
    %2114 = vmatprep.subr.mxu0 0.0
    %2115 = vmatpush1.msra.mxu0 0.0
    %2116 = vmatprep.subr.mxu0 0.0
    %2117 = vmatpush1.msra.mxu0 0.0
    %2118 = vmatprep.subr.mxu0 0.0
    %2119 = vmatpush1.msra.mxu0 0.0
    %2120 = vmatprep.subr.mxu0 0.0
    %2121 = vmatpush1.msra.mxu0 0.0
    %2122 = vmatprep.subr.mxu0 0.0
    %2123 = vmatpush1.msra.mxu0 0.0
    %2124 = vmatprep.subr.mxu0 0.0
    %2125 = vmatpush1.msra.mxu0 0.0
    %2126 = vmatprep.subr.mxu0 0.0
    %2127 = vmatpush1.msra.mxu0 0.0
    %2128 = vmatprep.subr.mxu0 0.0
    %2129 = vmatpush1.msra.mxu0 0.0
    %2130 = vmatprep.subr.mxu0 0.0
    %2131 = vmatpush1.msra.mxu0 0.0
    %2132 = vmatprep.subr.mxu0 0.0
    %2133 = vmatpush1.msra.mxu0 0.0
    %2134 = vmatprep.subr.mxu0 0.0
    %2135 = vmatpush1.msra.mxu0 0.0
    %2136 = vmatprep.subr.mxu0 0.0
    %2137 = vmatpush1.msra.mxu0 0.0
    %2138 = vmatprep.mubr.f32.mxu0 0.0
    %2139 = vmatmul.mubr.f32.gmra.mrb[0].mxu0 %v1902
    %v2140 = vpop.f32.mrb[0].mxu0
    %v2141 = vadd.f32 0.0, %v2140
    %v2142 = vpop.f32.mrb[0].mxu0
    %2143 = vdwg.mxu0
    %v2145 = vrot.slane %v2141, 2
    %v2147 = vadd.f32 %v136, %v2145
    %v2148 = vxor.u32 %v2147, 2147483648
    %v2149 = vmul.f32 %v2148, 1.442695
    %v2150 = vpow.pop %v2149
    %v2151 = vadd.f32 %v2150, 1.0
    %v2152 = vrcp.pop %v2151
    %v2153 = vmul.f32 1.0, %v2152
    %v2154 = vtanh.pop %v2147
    %v2156 = vrot.slane %v1891, 6
    %v2158 = vmul.f32 %v2153, %v2156
    %2160 = vrot.lane.b32.xlu0 %v2154, 64
    %v2161 = vpop.permute.xlu0 %2160
    %v2163 = vmul.f32 %v2153, %v2161
    %2165 = vrot.lane.b32.xlu0 %v2163, 32
    %v2166 = vpop.permute.xlu0 %2165
    %v2168 = vadd.f32 %v2158, %v2166
    %v2169 = vtanh.pop %v2168
    %2171 = vrot.lane.b32.xlu0 %v2169, 64
    %v2172 = vpop.permute.xlu0 %2171
    %v2174 = vmul.f32 %v2153, %v2172
    %v2176 = vrot.slane %v2174, 6
    %2177 = vrot.lane.b32.xlu0 %v2176, 32
    %v2178 = vpop.permute.xlu0 %2177
    %v2179 = vsel %vm139, %v2178, 0
    %2181 = vmatprep.subr.mxu0 0.0
    %2182 = vmatpush1.msra.mxu0 %v39
    %2183 = vmatprep.subr.mxu0 0.0
    %2184 = vmatpush1.msra.mxu0 %v40
    %2185 = vmatprep.subr.mxu0 0.0
    %2186 = vmatpush1.msra.mxu0 %v41
    %2187 = vmatprep.subr.mxu0 0.0
    %2188 = vmatpush1.msra.mxu0 %v42
    %2189 = vmatprep.subr.mxu0 0.0
    %2190 = vmatpush1.msra.mxu0 0.0
    %2191 = vmatprep.subr.mxu0 0.0
    %2192 = vmatpush1.msra.mxu0 0.0
    %2193 = vmatprep.subr.mxu0 0.0
    %2194 = vmatpush1.msra.mxu0 0.0
    %2195 = vmatprep.subr.mxu0 0.0
    %2196 = vmatpush1.msra.mxu0 0.0
    %2197 = vmatprep.subr.mxu0 0.0
    %2198 = vmatpush1.msra.mxu0 0.0
    %2199 = vmatprep.subr.mxu0 0.0
    %2200 = vmatpush1.msra.mxu0 0.0
    %2201 = vmatprep.subr.mxu0 0.0
    %2202 = vmatpush1.msra.mxu0 0.0
    %2203 = vmatprep.subr.mxu0 0.0
    %2204 = vmatpush1.msra.mxu0 0.0
    %2205 = vmatprep.subr.mxu0 0.0
    %2206 = vmatpush1.msra.mxu0 0.0
    %2207 = vmatprep.subr.mxu0 0.0
    %2208 = vmatpush1.msra.mxu0 0.0
    %2209 = vmatprep.subr.mxu0 0.0
    %2210 = vmatpush1.msra.mxu0 0.0
    %2211 = vmatprep.subr.mxu0 0.0
    %2212 = vmatpush1.msra.mxu0 0.0
    %2213 = vmatprep.subr.mxu0 0.0
    %2214 = vmatpush1.msra.mxu0 0.0
    %2215 = vmatprep.subr.mxu0 0.0
    %2216 = vmatpush1.msra.mxu0 0.0
    %2217 = vmatprep.subr.mxu0 0.0
    %2218 = vmatpush1.msra.mxu0 0.0
    %2219 = vmatprep.subr.mxu0 0.0
    %2220 = vmatpush1.msra.mxu0 0.0
    %2221 = vmatprep.subr.mxu0 0.0
    %2222 = vmatpush1.msra.mxu0 0.0
    %2223 = vmatprep.subr.mxu0 0.0
    %2224 = vmatpush1.msra.mxu0 0.0
    %2225 = vmatprep.subr.mxu0 0.0
    %2226 = vmatpush1.msra.mxu0 0.0
    %2227 = vmatprep.subr.mxu0 0.0
    %2228 = vmatpush1.msra.mxu0 0.0
    %2229 = vmatprep.subr.mxu0 0.0
    %2230 = vmatpush1.msra.mxu0 0.0
    %2231 = vmatprep.subr.mxu0 0.0
    %2232 = vmatpush1.msra.mxu0 0.0
    %2233 = vmatprep.subr.mxu0 0.0
    %2234 = vmatpush1.msra.mxu0 0.0
    %2235 = vmatprep.subr.mxu0 0.0
    %2236 = vmatpush1.msra.mxu0 0.0
    %2237 = vmatprep.subr.mxu0 0.0
    %2238 = vmatpush1.msra.mxu0 0.0
    %2239 = vmatprep.subr.mxu0 0.0
    %2240 = vmatpush1.msra.mxu0 0.0
    %2241 = vmatprep.subr.mxu0 0.0
    %2242 = vmatpush1.msra.mxu0 0.0
    %2243 = vmatprep.subr.mxu0 0.0
    %2244 = vmatpush1.msra.mxu0 0.0
    %2245 = vmatprep.mubr.f32.mxu0 0.0
    %2246 = vmatmul.mubr.f32.gmra.mrb[0].mxu0 %v2179
    %v2247 = vpop.f32.mrb[0].mxu0
    %v2248 = vadd.f32 %v242, %v2247
    %v2249 = vpop.f32.mrb[0].mxu0
    %2250 = vdwg.mxu0
    %2252 = vrot.lane.b32.xlu0 %v2073, 80
    %v2253 = vpop.permute.xlu0 %2252
    %v2254 = vsel %vm57, %v2253, 0
    %2256 = vmatprep.subr.mxu0 0.0
    %2257 = vmatpush1.msra.mxu0 %v43
    %2258 = vmatprep.subr.mxu0 0.0
    %2259 = vmatpush1.msra.mxu0 %v44
    %2260 = vmatprep.subr.mxu0 0.0
    %2261 = vmatpush1.msra.mxu0 0.0
    %2262 = vmatprep.subr.mxu0 0.0
    %2263 = vmatpush1.msra.mxu0 0.0
    %2264 = vmatprep.subr.mxu0 0.0
    %2265 = vmatpush1.msra.mxu0 0.0
    %2266 = vmatprep.subr.mxu0 0.0
    %2267 = vmatpush1.msra.mxu0 0.0
    %2268 = vmatprep.subr.mxu0 0.0
    %2269 = vmatpush1.msra.mxu0 0.0
    %2270 = vmatprep.subr.mxu0 0.0
    %2271 = vmatpush1.msra.mxu0 0.0
    %2272 = vmatprep.subr.mxu0 0.0
    %2273 = vmatpush1.msra.mxu0 0.0
    %2274 = vmatprep.subr.mxu0 0.0
    %2275 = vmatpush1.msra.mxu0 0.0
    %2276 = vmatprep.subr.mxu0 0.0
    %2277 = vmatpush1.msra.mxu0 0.0
    %2278 = vmatprep.subr.mxu0 0.0
    %2279 = vmatpush1.msra.mxu0 0.0
    %2280 = vmatprep.subr.mxu0 0.0
    %2281 = vmatpush1.msra.mxu0 0.0
    %2282 = vmatprep.subr.mxu0 0.0
    %2283 = vmatpush1.msra.mxu0 0.0
    %2284 = vmatprep.subr.mxu0 0.0
    %2285 = vmatpush1.msra.mxu0 0.0
    %2286 = vmatprep.subr.mxu0 0.0
    %2287 = vmatpush1.msra.mxu0 0.0
    %2288 = vmatprep.subr.mxu0 0.0
    %2289 = vmatpush1.msra.mxu0 0.0
    %2290 = vmatprep.subr.mxu0 0.0
    %2291 = vmatpush1.msra.mxu0 0.0
    %2292 = vmatprep.subr.mxu0 0.0
    %2293 = vmatpush1.msra.mxu0 0.0
    %2294 = vmatprep.subr.mxu0 0.0
    %2295 = vmatpush1.msra.mxu0 0.0
    %2296 = vmatprep.subr.mxu0 0.0
    %2297 = vmatpush1.msra.mxu0 0.0
    %2298 = vmatprep.subr.mxu0 0.0
    %2299 = vmatpush1.msra.mxu0 0.0
    %2300 = vmatprep.subr.mxu0 0.0
    %2301 = vmatpush1.msra.mxu0 0.0
    %2302 = vmatprep.subr.mxu0 0.0
    %2303 = vmatpush1.msra.mxu0 0.0
    %2304 = vmatprep.subr.mxu0 0.0
    %2305 = vmatpush1.msra.mxu0 0.0
    %2306 = vmatprep.subr.mxu0 0.0
    %2307 = vmatpush1.msra.mxu0 0.0
    %2308 = vmatprep.subr.mxu0 0.0
    %2309 = vmatpush1.msra.mxu0 0.0
    %2310 = vmatprep.subr.mxu0 0.0
    %2311 = vmatpush1.msra.mxu0 0.0
    %2312 = vmatprep.subr.mxu0 0.0
    %2313 = vmatpush1.msra.mxu0 0.0
    %2314 = vmatprep.subr.mxu0 0.0
    %2315 = vmatpush1.msra.mxu0 0.0
    %2316 = vmatprep.subr.mxu0 0.0
    %2317 = vmatpush1.msra.mxu0 0.0
    %2318 = vmatprep.subr.mxu0 0.0
    %2319 = vmatpush1.msra.mxu0 0.0
    %2320 = vmatprep.mubr.f32.mxu0 0.0
    %2321 = vmatmul.mubr.f32.gmra.mrb[0].mxu0 %v2254
    %v2322 = vpop.f32.mrb[0].mxu0
    %v2323 = vadd.f32 0.0, %v2322
    %v2324 = vpop.f32.mrb[0].mxu0
    %2325 = vdwg.mxu0
    %v2326 = vadd.f32 %v2248, %v2323
    %v2327 = vxor.u32 %v2326, 2147483648
    %v2328 = vmul.f32 %v2327, 1.442695
    %v2329 = vpow.pop %v2328
    %v2330 = vadd.f32 %v2329, 1.0
    %v2331 = vrcp.pop %v2330
    %v2332 = vmul.f32 1.0, %v2331
    %v2333 = vtanh.pop %v2326
    %v2334 = vmul.f32 %v2332, %v2067
    %2336 = vrot.lane.b32.xlu0 %v2333, 96
    %v2337 = vpop.permute.xlu0 %2336
    %v2339 = vmul.f32 %v2332, %v2337
    %2341 = vrot.lane.b32.xlu0 %v2339, 16
    %v2342 = vpop.permute.xlu0 %2341
    %v2344 = vadd.f32 %v2334, %v2342
    %v2345 = vtanh.pop %v2344
    %2347 = vrot.lane.b32.xlu0 %v2345, 32
    %v2348 = vpop.permute.xlu0 %2347
    %v2350 = vmul.f32 %v2332, %v2348
    %v2351 = vld [vmem:[%s7] sm:$0xff]
    %v2352 = vld [vmem:[%s7 + $0x8] sm:$0xff]
    %v2353 = vld [vmem:[%s7 + $0x10] sm:$0xff]
    %v2354 = vld [vmem:[%s7 + $0x18] sm:$0xff]
    %v2355 = vld [vmem:[%s8] sm:$0x1]
    %v2357 = vlaneseq
    %v2358 = vshrl.u32 %v2357, 7
    %v2359 = vsub.s32 0, %v2358
    %v2360 = vrot.slane %v2355, %v2359
    %2362 = vmatprep.subr.mxu0 0.0
    %2363 = vmatpush1.msra.mxu0 %v2351
    %2364 = vmatprep.subr.mxu0 0.0
    %2365 = vmatpush1.msra.mxu0 %v2352
    %2366 = vmatprep.subr.mxu0 0.0
    %2367 = vmatpush1.msra.mxu0 %v2353
    %2368 = vmatprep.subr.mxu0 0.0
    %2369 = vmatpush1.msra.mxu0 %v2354
    %2370 = vmatprep.subr.mxu0 0.0
    %2371 = vmatpush1.msra.mxu0 0.0
    %2372 = vmatprep.subr.mxu0 0.0
    %2373 = vmatpush1.msra.mxu0 0.0
    %2374 = vmatprep.subr.mxu0 0.0
    %2375 = vmatpush1.msra.mxu0 0.0
    %2376 = vmatprep.subr.mxu0 0.0
    %2377 = vmatpush1.msra.mxu0 0.0
    %2378 = vmatprep.subr.mxu0 0.0
    %2379 = vmatpush1.msra.mxu0 0.0
    %2380 = vmatprep.subr.mxu0 0.0
    %2381 = vmatpush1.msra.mxu0 0.0
    %2382 = vmatprep.subr.mxu0 0.0
    %2383 = vmatpush1.msra.mxu0 0.0
    %2384 = vmatprep.subr.mxu0 0.0
    %2385 = vmatpush1.msra.mxu0 0.0
    %2386 = vmatprep.subr.mxu0 0.0
    %2387 = vmatpush1.msra.mxu0 0.0
    %2388 = vmatprep.subr.mxu0 0.0
    %2389 = vmatpush1.msra.mxu0 0.0
    %2390 = vmatprep.subr.mxu0 0.0
    %2391 = vmatpush1.msra.mxu0 0.0
    %2392 = vmatprep.subr.mxu0 0.0
    %2393 = vmatpush1.msra.mxu0 0.0
    %2394 = vmatprep.subr.mxu0 0.0
    %2395 = vmatpush1.msra.mxu0 0.0
    %2396 = vmatprep.subr.mxu0 0.0
    %2397 = vmatpush1.msra.mxu0 0.0
    %2398 = vmatprep.subr.mxu0 0.0
    %2399 = vmatpush1.msra.mxu0 0.0
    %2400 = vmatprep.subr.mxu0 0.0
    %2401 = vmatpush1.msra.mxu0 0.0
    %2402 = vmatprep.subr.mxu0 0.0
    %2403 = vmatpush1.msra.mxu0 0.0
    %2404 = vmatprep.subr.mxu0 0.0
    %2405 = vmatpush1.msra.mxu0 0.0
    %2406 = vmatprep.subr.mxu0 0.0
    %2407 = vmatpush1.msra.mxu0 0.0
    %2408 = vmatprep.subr.mxu0 0.0
    %2409 = vmatpush1.msra.mxu0 0.0
    %2410 = vmatprep.subr.mxu0 0.0
    %2411 = vmatpush1.msra.mxu0 0.0
    %2412 = vmatprep.subr.mxu0 0.0
    %2413 = vmatpush1.msra.mxu0 0.0
    %2414 = vmatprep.subr.mxu0 0.0
    %2415 = vmatpush1.msra.mxu0 0.0
    %2416 = vmatprep.subr.mxu0 0.0
    %2417 = vmatpush1.msra.mxu0 0.0
    %2418 = vmatprep.subr.mxu0 0.0
    %2419 = vmatpush1.msra.mxu0 0.0
    %2420 = vmatprep.subr.mxu0 0.0
    %2421 = vmatpush1.msra.mxu0 0.0
    %2422 = vmatprep.subr.mxu0 0.0
    %2423 = vmatpush1.msra.mxu0 0.0
    %2424 = vmatprep.subr.mxu0 0.0
    %2425 = vmatpush1.msra.mxu0 0.0
    %2426 = vmatprep.mubr.f32.mxu0 0.0
    %2427 = vmatmul.mubr.f32.gmra.mrb[0].mxu0 %v2179
    %v2428 = vpop.f32.mrb[0].mxu0
    %v2429 = vadd.f32 %v2360, %v2428
    %v2430 = vpop.f32.mrb[0].mxu0
    %2431 = vdwg.mxu0
    %2432 = vst [vmem:[#allocation2] sm:$0x3] %v2429
    %2434 = vrot.lane.b32.xlu0 %v692, 96
    %v2435 = vpop.permute.xlu0 %2434
    %2437 = vrot.lane.b32.xlu0 %v969, 112
    %v2438 = vpop.permute.xlu0 %2437
    %2440 = vrot.lane.b32.xlu0 %v1519, 16
    %v2441 = vpop.permute.xlu0 %2440
    %2443 = vrot.lane.b32.xlu0 %v1796, 32
    %v2444 = vpop.permute.xlu0 %2443
    %2446 = vrot.lane.b32.xlu0 %v2073, 48
    %v2447 = vpop.permute.xlu0 %2446
    %2450 = vrot.lane.b32.xlu0 %v2350, 64
    %v2451 = vpop.permute.xlu0 %2450
    %v2453 = vsel %vm57, %v595, %v2435
    %v2454 = vsel %vm139, %v2453, %v2438
    %vm2455 = vcmask 392192
    %v2456 = vsel %vm2455, %v2454, %v1246
    %vm2457 = vcmask 523264
    %v2458 = vsel %vm2457, %v2456, %v2441
    %vm2459 = vcmask 654336
    %v2460 = vsel %vm2459, %v2458, %v2444
    %vm2461 = vcmask 785408
    %v2462 = vsel %vm2461, %v2460, %v2447
    %vm2463 = vcmask 916480
    %v2464 = vsel %vm2463, %v2462, %v2451
    %2465 = vst [vmem:[%s10] sm:$0x3] %v2464
    // Predicated region
    $region38: #{lstm_autoencoder_forward.1} parent=1 // pred_check
      _
    $region39: #{lstm_autoencoder_forward.1} parent=1 // pred_check_branch
      %2467 = sbr.rel (0) target = $region41
    $region40: #{lstm_autoencoder_forward.1} parent=1 // pred_region
      %s2469 = ssub.s32 32, 32
      %2470 = vsyncadd [#allocation3], %s2469
      %s2472 = sshll.u32 [#allocation2], 4
      %s2473 = int_to_ptr.vmem [resolvable:$true] %s2472
      %2475 = dma.vmem_to_hbm [thread:$0]  %s2473, 32, %s9, [#allocation3]
    $region41: #{lstm_autoencoder_forward.1} parent=1 // pred_fallthru
      _
    // Predicated region
    $region42: #{lstm_autoencoder_forward.1} parent=1 // pred_check
      _
    $region43: #{lstm_autoencoder_forward.1} parent=1 // pred_check_branch
      %2477 = sbr.rel (0) target = $region45
    $region44: #{lstm_autoencoder_forward.1} parent=1 // pred_region
      _
    $region45: #{lstm_autoencoder_forward.1} parent=1 // pred_fallthru
      _
    // Predicated region
    $region46: #{lstm_autoencoder_forward.1} parent=1 // pred_check
      _
    $region47: #{lstm_autoencoder_forward.1} parent=1 // pred_check_branch
      %2479 = sbr.rel (0) target = $region49
    $region48: #{lstm_autoencoder_forward.1} parent=1 // pred_region
      %2480 = dma.done [#allocation3], 32
    $region49: #{lstm_autoencoder_forward.1} parent=1 // pred_fallthru
      _
    // Predicated region
    $region50: #{lstm_autoencoder_forward.1} parent=1 // pred_check
      _
    $region51: #{lstm_autoencoder_forward.1} parent=1 // pred_check_branch
      %2482 = sbr.rel (0) target = $region53
    $region52: #{lstm_autoencoder_forward.1} parent=1 // pred_region
      _
    $region53: #{lstm_autoencoder_forward.1} parent=1 // pred_fallthru
      _
    %2483 = vsyncpa [#allocation3], 1

</llo_original>
